<compile_context>
chip_gen: v6e
topology: v6e:2x2x1
jax: 0.10.0
libtpu: 0.0.40
codegen_flags: <defaults>
</compile_context>

<pallas_src>
import functools

import jax
import jax.numpy as jnp
from jax.experimental import pallas as pl
from jax.experimental.pallas import tpu as pltpu

_LANE = 128      # TPU lane width: pad minor matmul dims to multiples of this.
_KH = _KW = 3    # 3x3 conv, stride 1, padding 1.
_B_TILE = 8      # images per grid step (>= 8 sublanes -> unmasked output store)


def _round_up(v, m):
    return ((v + m - 1) // m) * m


def _fused_kernel(patches_ref, wconv_ref, bconv_ref, wfc_ref, bfc_ref, out_ref,
                  *, b_tile, hw):
    """One grid step = B_TILE images: conv(im2col matmul)+bias+ReLU -> GAP -> linear."""
    k_pad = patches_ref.shape[-1]
    cout_pad = wconv_ref.shape[-1]

    # Single lane-dense MXU dot for the whole conv of the batch tile.
    patches = patches_ref[...].reshape(b_tile * hw, k_pad)          # [B*hw, 128]
    conv = jnp.dot(patches, wconv_ref[...],
                   preferred_element_type=jnp.float32)              # [B*hw, cout_pad]

    hrelu = jnp.maximum(conv + bconv_ref[...], 0.0)                  # bias + ReLU (f32)

    # Global average pool: per-image sum (1/hw folded into wfc in the wrapper).
    pooled = jnp.sum(hrelu.reshape(b_tile, hw, cout_pad), axis=1)    # [B, cout_pad]

    # Classifier head (lane-dense padded output, full-sublane M = B_TILE).
    logits = jnp.dot(pooled, wfc_ref[...],
                     preferred_element_type=jnp.float32) + bfc_ref[...]
    out_ref[...] = logits.astype(out_ref.dtype)                      # [B, ncls_pad]


def combine_backbone_classifier_forward(x_nchw, params, *,
                                        compute_dtype=jnp.float32):
    """Forward pass of CombineBaseModelWithClassifier.

    x_nchw: [N, Cin, H, W] float32 (PyTorch NCHW convention).
    Returns: [N, num_classes] float32.
    """
    conv_w_oihw = params["conv_w"]
    conv_b = params["conv_b"]
    fc_w = params["fc_w"]
    fc_b = params["fc_b"]

    N, Cin, H, W = x_nchw.shape
    Cout = conv_w_oihw.shape[0]
    num_classes = fc_w.shape[0]
    hw = H * W

    k_raw = _KH * _KW * Cin
    k_pad = _round_up(k_raw, _LANE)
    cout_pad = _round_up(Cout, _LANE)
    ncls_pad = _round_up(num_classes, _LANE)
    n_pad = _round_up(N, _B_TILE)

    # --- wrapper glue: im2col once, lane-dense + batch-padded -------------
    x_nhwc = jnp.transpose(x_nchw, (0, 2, 3, 1))                     # [N, H, W, Cin]
    xp = jnp.pad(x_nhwc, ((0, 0), (1, 1), (1, 1), (0, 0)))           # zero halo
    taps = [xp[:, dy:dy + H, dx:dx + W, :]
            for dy in range(_KH) for dx in range(_KW)]               # (dy,dx) major, c minor
    patches = jnp.concatenate(taps, axis=-1).reshape(N, hw, k_raw)   # [N, hw, 9*Cin]
    patches = jnp.pad(patches,
                      ((0, n_pad - N), (0, 0), (0, k_pad - k_raw)))
    patches = patches.astype(compute_dtype)                          # [n_pad, hw, 128]

    # Conv weight [Cout, Cin, kh, kw] -> [kh, kw, Cin, Cout] -> [9*Cin, Cout],
    # then zero-pad to [k_pad, cout_pad] (matches im2col column ordering).
    w_conv = jnp.transpose(conv_w_oihw, (2, 3, 1, 0)).reshape(k_raw, Cout)
    w_conv = jnp.pad(w_conv, ((0, k_pad - k_raw), (0, cout_pad - Cout)))
    w_conv = w_conv.astype(compute_dtype)
    b_conv = jnp.pad(conv_b.reshape(1, Cout).astype(jnp.float32),
                     ((0, 0), (0, cout_pad - Cout)))

    # fc weight [ncls, Cout] -> [cout_pad, ncls_pad]; fold GAP scale 1/hw in.
    w_fc = jnp.pad((fc_w.T / float(hw)).astype(jnp.float32),
                   ((0, cout_pad - Cout), (0, ncls_pad - num_classes)))
    b_fc = jnp.pad(fc_b.reshape(1, num_classes).astype(jnp.float32),
                   ((0, 0), (0, ncls_pad - num_classes)))

    kernel = functools.partial(_fused_kernel, b_tile=_B_TILE, hw=hw)

    bytes_accessed = (patches.size * patches.dtype.itemsize
                      + w_conv.size * w_conv.dtype.itemsize
                      + (b_conv.size + w_fc.size + b_fc.size) * 4
                      + n_pad * ncls_pad * 4)
    flops = (2 * n_pad * hw * k_pad * cout_pad
             + 2 * n_pad * cout_pad * ncls_pad)

    out = pl.pallas_call(
        kernel,
        out_shape=jax.ShapeDtypeStruct((n_pad, ncls_pad), jnp.float32),
        grid=(n_pad // _B_TILE,),
        in_specs=[
            # Streamed lane-dense batch-tile of im2col activations.
            pl.BlockSpec((_B_TILE, hw, k_pad), lambda i: (i, 0, 0)),
            # Weights / biases: constant index maps -> DMA'd once, VMEM-resident.
            pl.BlockSpec((k_pad, cout_pad), lambda i: (0, 0)),
            pl.BlockSpec((1, cout_pad), lambda i: (0, 0)),
            pl.BlockSpec((cout_pad, ncls_pad), lambda i: (0, 0)),
            pl.BlockSpec((1, ncls_pad), lambda i: (0, 0)),
        ],
        out_specs=pl.BlockSpec((_B_TILE, ncls_pad), lambda i: (i, 0)),
        compiler_params=pltpu.CompilerParams(
            dimension_semantics=("parallel",),      # megacore on v7x; no-op v5e/v6e
            vmem_limit_bytes=32 * 1024 * 1024,
        ),
        cost_estimate=pl.CostEstimate(
            flops=flops, transcendentals=0, bytes_accessed=bytes_accessed),
    )(patches, w_conv, b_conv, w_fc, b_fc)

    return out[:N, :num_classes]


def _reference_forward(x_nchw, params):
    """Pure-JAX reference for correctness checking."""
    conv_w, conv_b, fc_w, fc_b = (params["conv_w"], params["conv_b"],
                                  params["fc_w"], params["fc_b"])
    y = jax.lax.conv_general_dilated(
        x_nchw, conv_w, window_strides=(1, 1), padding=((1, 1), (1, 1)),
        dimension_numbers=("NCHW", "OIHW", "NCHW"))
    y = y + conv_b[None, :, None, None]
    y = jnp.maximum(y, 0.0)
    pooled = jnp.mean(y, axis=(2, 3))                                # [N, Cout]
    return pooled @ fc_w.T + fc_b


if __name__ == "__main__":
    N, Cin, H, W = 2, 4, 16, 16
    Cout, num_classes = 32, 10

    key = jax.random.PRNGKey(0)
    k_x, k_cw, k_cb, k_fw, k_fb = jax.random.split(key, 5)
    x = jax.random.normal(k_x, (N, Cin, H, W), dtype=jnp.float32)
    params = {
        "conv_w": 0.1 * jax.random.normal(k_cw, (Cout, Cin, 3, 3), jnp.float32),
        "conv_b": 0.1 * jax.random.normal(k_cb, (Cout,), jnp.float32),
        "fc_w": 0.1 * jax.random.normal(k_fw, (num_classes, Cout), jnp.float32),
        "fc_b": 0.1 * jax.random.normal(k_fb, (num_classes,), jnp.float32),
    }

    ref = jax.block_until_ready(_reference_forward(x, params))

    # f32 path (default; recommended for v5e).
    out_f32 = jax.block_until_ready(
        combine_backbone_classifier_forward(x, params, compute_dtype=jnp.float32))
    assert out_f32.shape == (N, num_classes)
    assert jnp.allclose(out_f32, ref, atol=1e-4, rtol=1e-4), "f32 mismatch vs reference"

    # bf16 conv-operand path (v6e/v7x MXU), f32 accumulation + f32 head.
    # Widened tolerance is intentional: activations are cast to bf16 too.
    out_bf16 = jax.block_until_ready(
        combine_backbone_classifier_forward(x, params, compute_dtype=jnp.bfloat16))
    assert out_bf16.shape == (N, num_classes)
    assert jnp.allclose(out_bf16, ref, atol=3e-2, rtol=3e-2), "bf16 mismatch vs reference"

    print("KERNEL_OK")
</pallas_src>

<mosaic_0001>
module attributes {stable_mosaic.version = 11 : i64} {
  func.func @_fused_kernel(%arg0: i32, %arg1: memref<8x256x128xf32, #tpu.memory_space<vmem>>, %arg2: memref<128x128xf32, #tpu.memory_space<vmem>>, %arg3: memref<1x128xf32, #tpu.memory_space<vmem>>, %arg4: memref<128x128xf32, #tpu.memory_space<vmem>>, %arg5: memref<1x128xf32, #tpu.memory_space<vmem>>, %arg6: memref<8x128xf32, #tpu.memory_space<vmem>>) attributes {dimension_semantics = [#tpu.dimension_semantics<parallel>], iteration_bounds = array<i64: 1>, scalar_prefetch = 0 : i64, scratch_operands = 0 : i64, tpu.core_type = #tpu.core_type<tc>, window_params = [{transform_indices = @transform_0, window_bounds = array<i64: 8, 256, 128>}, {pipeline_mode = #tpu.pipeline_mode<synchronous>, transform_indices = @transform_1, window_bounds = array<i64: 128, 128>}, {pipeline_mode = #tpu.pipeline_mode<synchronous>, transform_indices = @transform_2, window_bounds = array<i64: 1, 128>}, {pipeline_mode = #tpu.pipeline_mode<synchronous>, transform_indices = @transform_3, window_bounds = array<i64: 128, 128>}, {pipeline_mode = #tpu.pipeline_mode<synchronous>, transform_indices = @transform_4, window_bounds = array<i64: 1, 128>}, {transform_indices = @transform_5, window_bounds = array<i64: 8, 128>}]} {
    %c0 = arith.constant 0 : index
    %c0_0 = arith.constant 0 : index
    %c0_1 = arith.constant 0 : index
    %0 = vector.load %arg1[%c0, %c0_0, %c0_1] : memref<8x256x128xf32, #tpu.memory_space<vmem>>, vector<8x256x128xf32>
    %1 = vector.shape_cast %0 : vector<8x256x128xf32> to vector<2048x128xf32>
    %c0_2 = arith.constant 0 : index
    %c0_3 = arith.constant 0 : index
    %2 = vector.load %arg2[%c0_2, %c0_3] : memref<128x128xf32, #tpu.memory_space<vmem>>, vector<128x128xf32>
    %cst = arith.constant dense<0.000000e+00> : vector<2048x128xf32>
    %3 = tpu.matmul %1, %2, %cst {dimension_numbers = #tpu.dot_dimension_numbers<[1], [0], [0], [1], [0, 0, 1, 1], [], []>} : vector<2048x128xf32>, vector<128x128xf32>, vector<2048x128xf32> -> vector<2048x128xf32>
    %c0_4 = arith.constant 0 : index
    %c0_5 = arith.constant 0 : index
    %4 = vector.load %arg3[%c0_4, %c0_5] : memref<1x128xf32, #tpu.memory_space<vmem>>, vector<1x128xf32>
    %5 = vector.broadcast %4 : vector<1x128xf32> to vector<2048x128xf32>
    %6 = arith.addf %3, %5 : vector<2048x128xf32>
    %cst_6 = arith.constant 0.000000e+00 : f32
    %7 = vector.broadcast %cst_6 : f32 to vector<2048x128xf32>
    %8 = arith.maximumf %6, %7 : vector<2048x128xf32>
    %9 = vector.shape_cast %8 : vector<2048x128xf32> to vector<8x256x128xf32>
    %cst_7 = arith.constant dense<0.000000e+00> : vector<8x128xf32>
    %10 = vector.multi_reduction <add>, %9, %cst_7 [1] : vector<8x256x128xf32> to vector<8x128xf32>
    %c0_8 = arith.constant 0 : index
    %c0_9 = arith.constant 0 : index
    %11 = vector.load %arg4[%c0_8, %c0_9] : memref<128x128xf32, #tpu.memory_space<vmem>>, vector<128x128xf32>
    %cst_10 = arith.constant dense<0.000000e+00> : vector<8x128xf32>
    %12 = tpu.matmul %10, %11, %cst_10 {dimension_numbers = #tpu.dot_dimension_numbers<[1], [0], [0], [1], [0, 0, 1, 1], [], []>} : vector<8x128xf32>, vector<128x128xf32>, vector<8x128xf32> -> vector<8x128xf32>
    %c0_11 = arith.constant 0 : index
    %c0_12 = arith.constant 0 : index
    %13 = vector.load %arg5[%c0_11, %c0_12] : memref<1x128xf32, #tpu.memory_space<vmem>>, vector<1x128xf32>
    %14 = vector.broadcast %13 : vector<1x128xf32> to vector<8x128xf32>
    %15 = arith.addf %12, %14 : vector<8x128xf32>
    %c0_13 = arith.constant 0 : index
    %c0_14 = arith.constant 0 : index
    %16 = vector.load %arg6[%c0_13, %c0_14] : memref<8x128xf32, #tpu.memory_space<vmem>>, vector<8x128xf32>
    tpu.vector_store %arg6[%c0_13, %c0_14], %15 {strides = array<i32>} : memref<8x128xf32, #tpu.memory_space<vmem>>, vector<8x128xf32>,
    return
  }
  func.func @transform_0(%arg0: i32) -> (i32, i32, i32) {
    %c0_i32 = arith.constant 0 : i32
    %c0_i32_0 = arith.constant 0 : i32
    %c0_i32_1 = arith.constant 0 : i32
    return %arg0, %c0_i32, %c0_i32_0 : i32, i32, i32
  }
  func.func @transform_1(%arg0: i32) -> (i32, i32) {
    %c0_i32 = arith.constant 0 : i32
    %c0_i32_0 = arith.constant 0 : i32
    %c0_i32_1 = arith.constant 0 : i32
    return %c0_i32, %c0_i32_0 : i32, i32
  }
  func.func @transform_2(%arg0: i32) -> (i32, i32) {
    %c0_i32 = arith.constant 0 : i32
    %c0_i32_0 = arith.constant 0 : i32
    %c0_i32_1 = arith.constant 0 : i32
    return %c0_i32, %c0_i32_0 : i32, i32
  }
  func.func @transform_3(%arg0: i32) -> (i32, i32) {
    %c0_i32 = arith.constant 0 : i32
    %c0_i32_0 = arith.constant 0 : i32
    %c0_i32_1 = arith.constant 0 : i32
    return %c0_i32, %c0_i32_0 : i32, i32
  }
  func.func @transform_4(%arg0: i32) -> (i32, i32) {
    %c0_i32 = arith.constant 0 : i32
    %c0_i32_0 = arith.constant 0 : i32
    %c0_i32_1 = arith.constant 0 : i32
    return %c0_i32, %c0_i32_0 : i32, i32
  }
  func.func @transform_5(%arg0: i32) -> (i32, i32) {
    %c0_i32 = arith.constant 0 : i32
    %c0_i32_0 = arith.constant 0 : i32
    return %arg0, %c0_i32 : i32, i32
  }
}

</mosaic_0001>

<llo_original>
// kernel: tpu_custom_call.1
$region0: #{tpu_custom_call.1}
  #allocation0 [shape = 'u32[]', space=smem, size = 0x4, offset = 0x4, fixed_abs, tag = 'smem constant byte address 0x4 - core index']
  #allocation1 [shape = 'u32[144,128]{1,0:T(1,128)}', space=vmem, size = 0x12000, scoped, tag = 'internal scratch']
  %s0 = inlined_call_operand.hbm [shape: f32[8,256,128], index: 0, kind: input, shape index: {}]
  %s1 = inlined_call_operand.hbm [shape: f32[128,128], index: 1, kind: input, shape index: {}]
  %s2 = inlined_call_operand.vmem [shape: f32[1,128], index: 2, kind: input, shape index: {}]
  %s3 = inlined_call_operand.hbm [shape: f32[128,128], index: 3, kind: input, shape index: {}]
  %s4 = inlined_call_operand.vmem [shape: f32[1,128], index: 4, kind: input, shape index: {}]
  %s5 = inlined_call_operand.hbm [shape: f32[8,128], index: 5, kind: output, shape index: {}]
  %s6 = sld [smem:[#allocation0]]
  $region42: #{tpu_custom_call.1} parent=0
    _
  %s8 = ssub.s32 1, %s6
  %s9 = scalar_select 0, %s8, %s6
  $region1: #{tpu_custom_call.1} parent=0
    #allocation2 [shape = 'u8[1048576]{0}', space=vmem, size = 0x100000, scoped, tag = 'input window, operand 0, single buffered']
    #allocation3 [shape = 's32[1]{0}', space=sflag, size = 0x4, scoped, tag = 'scoped memory for tpu_custom_call.1']
    #allocation4 [shape = 's32[1]{0}', space=sflag, size = 0x4, scoped, tag = 'scoped memory for tpu_custom_call.1']
    #allocation5 [shape = 'u8[65536]{0}', space=vmem, size = 0x10000, scoped, tag = 'input window, operand 1, single buffered']
    #allocation6 [shape = 's32[1]{0}', space=sflag, size = 0x4, scoped, tag = 'scoped memory for tpu_custom_call.1']
    #allocation7 [shape = 'u8[65536]{0}', space=vmem, size = 0x10000, scoped, tag = 'input window, operand 3, single buffered']
    #allocation8 [shape = 'u8[4096]{0}', space=vmem, size = 0x1000, scoped, tag = 'output window, operand 0, single buffered']
    %10 = vsyncpa [#allocation3], 0
    %11 = vsyncpa [#allocation6], 0
    %12 = vsyncpa [#allocation4], 0
    // Predicated region
    $region2: #{tpu_custom_call.1} parent=1 // pred_check
      _
    $region3: #{tpu_custom_call.1} parent=1 // pred_check_branch
      %14 = sbr.rel (0) target = $region5
    $region4: #{tpu_custom_call.1} parent=1 // pred_region
      %s16 = ssub.s32 32768, 32768
      %17 = vsyncadd [#allocation3], %s16
      %s18 = sshll.u32 [#allocation2], 4
      %s19 = int_to_ptr.vmem [resolvable:$true] %s18
      %24 = dma.hbm_to_vmem [thread:$0]  %s0, 32768, %s19, [#allocation3], 128, 128, 8
    $region5: #{tpu_custom_call.1} parent=1 // pred_fallthru
      _
    // Predicated region
    $region6: #{tpu_custom_call.1} parent=1 // pred_check
      _
    $region7: #{tpu_custom_call.1} parent=1 // pred_check_branch
      %26 = sbr.rel (0) target = $region9
    $region8: #{tpu_custom_call.1} parent=1 // pred_region
      %s28 = ssub.s32 2048, 2048
      %29 = vsyncadd [#allocation6], %s28
      %s30 = sshll.u32 [#allocation5], 4
      %s31 = int_to_ptr.vmem [resolvable:$true] %s30
      %36 = dma.hbm_to_vmem [thread:$0]  %s1, 2048, %s31, [#allocation6], 128, 128, 8
    $region9: #{tpu_custom_call.1} parent=1 // pred_fallthru
      _
    // Predicated region
    $region10: #{tpu_custom_call.1} parent=1 // pred_check
      _
    $region11: #{tpu_custom_call.1} parent=1 // pred_check_branch
      %38 = sbr.rel (0) target = $region13
    $region12: #{tpu_custom_call.1} parent=1 // pred_region
      _
    $region13: #{tpu_custom_call.1} parent=1 // pred_fallthru
      _
    // Predicated region
    $region14: #{tpu_custom_call.1} parent=1 // pred_check
      _
    $region15: #{tpu_custom_call.1} parent=1 // pred_check_branch
      %40 = sbr.rel (0) target = $region17
    $region16: #{tpu_custom_call.1} parent=1 // pred_region
      %s42 = ssub.s32 2048, 2048
      %43 = vsyncadd [#allocation6], %s42
      %s44 = sshll.u32 [#allocation7], 4
      %s45 = int_to_ptr.vmem [resolvable:$true] %s44
      %50 = dma.hbm_to_vmem [thread:$0]  %s3, 2048, %s45, [#allocation6], 128, 128, 8
    $region17: #{tpu_custom_call.1} parent=1 // pred_fallthru
      _
    // Predicated region
    $region18: #{tpu_custom_call.1} parent=1 // pred_check
      _
    $region19: #{tpu_custom_call.1} parent=1 // pred_check_branch
      %52 = sbr.rel (0) target = $region21
    $region20: #{tpu_custom_call.1} parent=1 // pred_region
      _
    $region21: #{tpu_custom_call.1} parent=1 // pred_fallthru
      _
    // Predicated region
    $region22: #{tpu_custom_call.1} parent=1 // pred_check
      _
    $region23: #{tpu_custom_call.1} parent=1 // pred_check_branch
      %54 = sbr.rel (0) target = $region25
    $region24: #{tpu_custom_call.1} parent=1 // pred_region
      %55 = dma.done [#allocation3], 32768
    $region25: #{tpu_custom_call.1} parent=1 // pred_fallthru
      _
    // Predicated region
    $region26: #{tpu_custom_call.1} parent=1 // pred_check
      _
    $region27: #{tpu_custom_call.1} parent=1 // pred_check_branch
      %57 = sbr.rel (0) target = $region29
    $region28: #{tpu_custom_call.1} parent=1 // pred_region
      %58 = dma.done [#allocation6], 2048
    $region29: #{tpu_custom_call.1} parent=1 // pred_fallthru
      _
    // Predicated region
    $region30: #{tpu_custom_call.1} parent=1 // pred_check
      _
    $region31: #{tpu_custom_call.1} parent=1 // pred_check_branch
      %60 = sbr.rel (0) target = $region33
    $region32: #{tpu_custom_call.1} parent=1 // pred_region
      %61 = dma.done [#allocation6], 2048
    $region33: #{tpu_custom_call.1} parent=1 // pred_fallthru
      _
    %v62 = vld [vmem:[#allocation2] sm:$0xff]
    %v63 = vld [vmem:[#allocation2 + $0x8] sm:$0xff]
    %v64 = vld [vmem:[#allocation2 + $0x10] sm:$0xff]
    %v65 = vld [vmem:[#allocation2 + $0x18] sm:$0xff]
    %v66 = vld [vmem:[#allocation2 + $0x20] sm:$0xff]
    %v67 = vld [vmem:[#allocation2 + $0x28] sm:$0xff]
    %v68 = vld [vmem:[#allocation2 + $0x30] sm:$0xff]
    %v69 = vld [vmem:[#allocation2 + $0x38] sm:$0xff]
    %v70 = vld [vmem:[#allocation2 + $0x40] sm:$0xff]
    %v71 = vld [vmem:[#allocation2 + $0x48] sm:$0xff]
    %v72 = vld [vmem:[#allocation2 + $0x50] sm:$0xff]
    %v73 = vld [vmem:[#allocation2 + $0x58] sm:$0xff]
    %v74 = vld [vmem:[#allocation2 + $0x60] sm:$0xff]
    %v75 = vld [vmem:[#allocation2 + $0x68] sm:$0xff]
    %v76 = vld [vmem:[#allocation2 + $0x70] sm:$0xff]
    %v77 = vld [vmem:[#allocation2 + $0x78] sm:$0xff]
    %v78 = vld [vmem:[#allocation2 + $0x80] sm:$0xff]
    %v79 = vld [vmem:[#allocation2 + $0x88] sm:$0xff]
    %v80 = vld [vmem:[#allocation2 + $0x90] sm:$0xff]
    %v81 = vld [vmem:[#allocation2 + $0x98] sm:$0xff]
    %v82 = vld [vmem:[#allocation2 + $0xa0] sm:$0xff]
    %v83 = vld [vmem:[#allocation2 + $0xa8] sm:$0xff]
    %v84 = vld [vmem:[#allocation2 + $0xb0] sm:$0xff]
    %v85 = vld [vmem:[#allocation2 + $0xb8] sm:$0xff]
    %v86 = vld [vmem:[#allocation2 + $0xc0] sm:$0xff]
    %v87 = vld [vmem:[#allocation2 + $0xc8] sm:$0xff]
    %v88 = vld [vmem:[#allocation2 + $0xd0] sm:$0xff]
    %v89 = vld [vmem:[#allocation2 + $0xd8] sm:$0xff]
    %v90 = vld [vmem:[#allocation2 + $0xe0] sm:$0xff]
    %v91 = vld [vmem:[#allocation2 + $0xe8] sm:$0xff]
    %v92 = vld [vmem:[#allocation2 + $0xf0] sm:$0xff]
    %v93 = vld [vmem:[#allocation2 + $0xf8] sm:$0xff]
    %v94 = vld [vmem:[#allocation2 + $0x100] sm:$0xff]
    %v95 = vld [vmem:[#allocation2 + $0x108] sm:$0xff]
    %v96 = vld [vmem:[#allocation2 + $0x110] sm:$0xff]
    %v97 = vld [vmem:[#allocation2 + $0x118] sm:$0xff]
    %v98 = vld [vmem:[#allocation2 + $0x120] sm:$0xff]
    %v99 = vld [vmem:[#allocation2 + $0x128] sm:$0xff]
    %v100 = vld [vmem:[#allocation2 + $0x130] sm:$0xff]
    %v101 = vld [vmem:[#allocation2 + $0x138] sm:$0xff]
    %v102 = vld [vmem:[#allocation2 + $0x140] sm:$0xff]
    %v103 = vld [vmem:[#allocation2 + $0x148] sm:$0xff]
    %v104 = vld [vmem:[#allocation2 + $0x150] sm:$0xff]
    %v105 = vld [vmem:[#allocation2 + $0x158] sm:$0xff]
    %v106 = vld [vmem:[#allocation2 + $0x160] sm:$0xff]
    %v107 = vld [vmem:[#allocation2 + $0x168] sm:$0xff]
    %v108 = vld [vmem:[#allocation2 + $0x170] sm:$0xff]
    %v109 = vld [vmem:[#allocation2 + $0x178] sm:$0xff]
    %v110 = vld [vmem:[#allocation2 + $0x180] sm:$0xff]
    %v111 = vld [vmem:[#allocation2 + $0x188] sm:$0xff]
    %v112 = vld [vmem:[#allocation2 + $0x190] sm:$0xff]
    %v113 = vld [vmem:[#allocation2 + $0x198] sm:$0xff]
    %v114 = vld [vmem:[#allocation2 + $0x1a0] sm:$0xff]
    %v115 = vld [vmem:[#allocation2 + $0x1a8] sm:$0xff]
    %v116 = vld [vmem:[#allocation2 + $0x1b0] sm:$0xff]
    %v117 = vld [vmem:[#allocation2 + $0x1b8] sm:$0xff]
    %v118 = vld [vmem:[#allocation2 + $0x1c0] sm:$0xff]
    %v119 = vld [vmem:[#allocation2 + $0x1c8] sm:$0xff]
    %v120 = vld [vmem:[#allocation2 + $0x1d0] sm:$0xff]
    %v121 = vld [vmem:[#allocation2 + $0x1d8] sm:$0xff]
    %v122 = vld [vmem:[#allocation2 + $0x1e0] sm:$0xff]
    %v123 = vld [vmem:[#allocation2 + $0x1e8] sm:$0xff]
    %v124 = vld [vmem:[#allocation2 + $0x1f0] sm:$0xff]
    %v125 = vld [vmem:[#allocation2 + $0x1f8] sm:$0xff]
    %v126 = vld [vmem:[#allocation2 + $0x200] sm:$0xff]
    %v127 = vld [vmem:[#allocation2 + $0x208] sm:$0xff]
    %v128 = vld [vmem:[#allocation2 + $0x210] sm:$0xff]
    %v129 = vld [vmem:[#allocation2 + $0x218] sm:$0xff]
    %v130 = vld [vmem:[#allocation2 + $0x220] sm:$0xff]
    %v131 = vld [vmem:[#allocation2 + $0x228] sm:$0xff]
    %v132 = vld [vmem:[#allocation2 + $0x230] sm:$0xff]
    %v133 = vld [vmem:[#allocation2 + $0x238] sm:$0xff]
    %v134 = vld [vmem:[#allocation2 + $0x240] sm:$0xff]
    %v135 = vld [vmem:[#allocation2 + $0x248] sm:$0xff]
    %v136 = vld [vmem:[#allocation2 + $0x250] sm:$0xff]
    %v137 = vld [vmem:[#allocation2 + $0x258] sm:$0xff]
    %v138 = vld [vmem:[#allocation2 + $0x260] sm:$0xff]
    %v139 = vld [vmem:[#allocation2 + $0x268] sm:$0xff]
    %v140 = vld [vmem:[#allocation2 + $0x270] sm:$0xff]
    %v141 = vld [vmem:[#allocation2 + $0x278] sm:$0xff]
    %v142 = vld [vmem:[#allocation2 + $0x280] sm:$0xff]
    %v143 = vld [vmem:[#allocation2 + $0x288] sm:$0xff]
    %v144 = vld [vmem:[#allocation2 + $0x290] sm:$0xff]
    %v145 = vld [vmem:[#allocation2 + $0x298] sm:$0xff]
    %v146 = vld [vmem:[#allocation2 + $0x2a0] sm:$0xff]
    %v147 = vld [vmem:[#allocation2 + $0x2a8] sm:$0xff]
    %v148 = vld [vmem:[#allocation2 + $0x2b0] sm:$0xff]
    %v149 = vld [vmem:[#allocation2 + $0x2b8] sm:$0xff]
    %v150 = vld [vmem:[#allocation2 + $0x2c0] sm:$0xff]
    %v151 = vld [vmem:[#allocation2 + $0x2c8] sm:$0xff]
    %v152 = vld [vmem:[#allocation2 + $0x2d0] sm:$0xff]
    %v153 = vld [vmem:[#allocation2 + $0x2d8] sm:$0xff]
    %v154 = vld [vmem:[#allocation2 + $0x2e0] sm:$0xff]
    %v155 = vld [vmem:[#allocation2 + $0x2e8] sm:$0xff]
    %v156 = vld [vmem:[#allocation2 + $0x2f0] sm:$0xff]
    %v157 = vld [vmem:[#allocation2 + $0x2f8] sm:$0xff]
    %v158 = vld [vmem:[#allocation2 + $0x300] sm:$0xff]
    %v159 = vld [vmem:[#allocation2 + $0x308] sm:$0xff]
    %v160 = vld [vmem:[#allocation2 + $0x310] sm:$0xff]
    %v161 = vld [vmem:[#allocation2 + $0x318] sm:$0xff]
    %v162 = vld [vmem:[#allocation2 + $0x320] sm:$0xff]
    %v163 = vld [vmem:[#allocation2 + $0x328] sm:$0xff]
    %v164 = vld [vmem:[#allocation2 + $0x330] sm:$0xff]
    %v165 = vld [vmem:[#allocation2 + $0x338] sm:$0xff]
    %v166 = vld [vmem:[#allocation2 + $0x340] sm:$0xff]
    %v167 = vld [vmem:[#allocation2 + $0x348] sm:$0xff]
    %v168 = vld [vmem:[#allocation2 + $0x350] sm:$0xff]
    %v169 = vld [vmem:[#allocation2 + $0x358] sm:$0xff]
    %v170 = vld [vmem:[#allocation2 + $0x360] sm:$0xff]
    %v171 = vld [vmem:[#allocation2 + $0x368] sm:$0xff]
    %v172 = vld [vmem:[#allocation2 + $0x370] sm:$0xff]
    %v173 = vld [vmem:[#allocation2 + $0x378] sm:$0xff]
    %v174 = vld [vmem:[#allocation2 + $0x380] sm:$0xff]
    %v175 = vld [vmem:[#allocation2 + $0x388] sm:$0xff]
    %v176 = vld [vmem:[#allocation2 + $0x390] sm:$0xff]
    %v177 = vld [vmem:[#allocation2 + $0x398] sm:$0xff]
    %v178 = vld [vmem:[#allocation2 + $0x3a0] sm:$0xff]
    %v179 = vld [vmem:[#allocation2 + $0x3a8] sm:$0xff]
    %v180 = vld [vmem:[#allocation2 + $0x3b0] sm:$0xff]
    %v181 = vld [vmem:[#allocation2 + $0x3b8] sm:$0xff]
    %v182 = vld [vmem:[#allocation2 + $0x3c0] sm:$0xff]
    %v183 = vld [vmem:[#allocation2 + $0x3c8] sm:$0xff]
    %v184 = vld [vmem:[#allocation2 + $0x3d0] sm:$0xff]
    %v185 = vld [vmem:[#allocation2 + $0x3d8] sm:$0xff]
    %v186 = vld [vmem:[#allocation2 + $0x3e0] sm:$0xff]
    %v187 = vld [vmem:[#allocation2 + $0x3e8] sm:$0xff]
    %v188 = vld [vmem:[#allocation2 + $0x3f0] sm:$0xff]
    %v189 = vld [vmem:[#allocation2 + $0x3f8] sm:$0xff]
    %v190 = vld [vmem:[#allocation2 + $0x400] sm:$0xff]
    %v191 = vld [vmem:[#allocation2 + $0x408] sm:$0xff]
    %v192 = vld [vmem:[#allocation2 + $0x410] sm:$0xff]
    %v193 = vld [vmem:[#allocation2 + $0x418] sm:$0xff]
    %v194 = vld [vmem:[#allocation2 + $0x420] sm:$0xff]
    %v195 = vld [vmem:[#allocation2 + $0x428] sm:$0xff]
    %v196 = vld [vmem:[#allocation2 + $0x430] sm:$0xff]
    %v197 = vld [vmem:[#allocation2 + $0x438] sm:$0xff]
    %v198 = vld [vmem:[#allocation2 + $0x440] sm:$0xff]
    %v199 = vld [vmem:[#allocation2 + $0x448] sm:$0xff]
    %v200 = vld [vmem:[#allocation2 + $0x450] sm:$0xff]
    %v201 = vld [vmem:[#allocation2 + $0x458] sm:$0xff]
    %v202 = vld [vmem:[#allocation2 + $0x460] sm:$0xff]
    %v203 = vld [vmem:[#allocation2 + $0x468] sm:$0xff]
    %v204 = vld [vmem:[#allocation2 + $0x470] sm:$0xff]
    %v205 = vld [vmem:[#allocation2 + $0x478] sm:$0xff]
    %v206 = vld [vmem:[#allocation2 + $0x480] sm:$0xff]
    %v207 = vld [vmem:[#allocation2 + $0x488] sm:$0xff]
    %v208 = vld [vmem:[#allocation2 + $0x490] sm:$0xff]
    %v209 = vld [vmem:[#allocation2 + $0x498] sm:$0xff]
    %v210 = vld [vmem:[#allocation2 + $0x4a0] sm:$0xff]
    %v211 = vld [vmem:[#allocation2 + $0x4a8] sm:$0xff]
    %v212 = vld [vmem:[#allocation2 + $0x4b0] sm:$0xff]
    %v213 = vld [vmem:[#allocation2 + $0x4b8] sm:$0xff]
    %v214 = vld [vmem:[#allocation2 + $0x4c0] sm:$0xff]
    %v215 = vld [vmem:[#allocation2 + $0x4c8] sm:$0xff]
    %v216 = vld [vmem:[#allocation2 + $0x4d0] sm:$0xff]
    %v217 = vld [vmem:[#allocation2 + $0x4d8] sm:$0xff]
    %v218 = vld [vmem:[#allocation2 + $0x4e0] sm:$0xff]
    %v219 = vld [vmem:[#allocation2 + $0x4e8] sm:$0xff]
    %v220 = vld [vmem:[#allocation2 + $0x4f0] sm:$0xff]
    %v221 = vld [vmem:[#allocation2 + $0x4f8] sm:$0xff]
    %v222 = vld [vmem:[#allocation2 + $0x500] sm:$0xff]
    %v223 = vld [vmem:[#allocation2 + $0x508] sm:$0xff]
    %v224 = vld [vmem:[#allocation2 + $0x510] sm:$0xff]
    %v225 = vld [vmem:[#allocation2 + $0x518] sm:$0xff]
    %v226 = vld [vmem:[#allocation2 + $0x520] sm:$0xff]
    %v227 = vld [vmem:[#allocation2 + $0x528] sm:$0xff]
    %v228 = vld [vmem:[#allocation2 + $0x530] sm:$0xff]
    %v229 = vld [vmem:[#allocation2 + $0x538] sm:$0xff]
    %v230 = vld [vmem:[#allocation2 + $0x540] sm:$0xff]
    %v231 = vld [vmem:[#allocation2 + $0x548] sm:$0xff]
    %v232 = vld [vmem:[#allocation2 + $0x550] sm:$0xff]
    %v233 = vld [vmem:[#allocation2 + $0x558] sm:$0xff]
    %v234 = vld [vmem:[#allocation2 + $0x560] sm:$0xff]
    %v235 = vld [vmem:[#allocation2 + $0x568] sm:$0xff]
    %v236 = vld [vmem:[#allocation2 + $0x570] sm:$0xff]
    %v237 = vld [vmem:[#allocation2 + $0x578] sm:$0xff]
    %v238 = vld [vmem:[#allocation2 + $0x580] sm:$0xff]
    %v239 = vld [vmem:[#allocation2 + $0x588] sm:$0xff]
    %v240 = vld [vmem:[#allocation2 + $0x590] sm:$0xff]
    %v241 = vld [vmem:[#allocation2 + $0x598] sm:$0xff]
    %v242 = vld [vmem:[#allocation2 + $0x5a0] sm:$0xff]
    %v243 = vld [vmem:[#allocation2 + $0x5a8] sm:$0xff]
    %v244 = vld [vmem:[#allocation2 + $0x5b0] sm:$0xff]
    %v245 = vld [vmem:[#allocation2 + $0x5b8] sm:$0xff]
    %v246 = vld [vmem:[#allocation2 + $0x5c0] sm:$0xff]
    %v247 = vld [vmem:[#allocation2 + $0x5c8] sm:$0xff]
    %v248 = vld [vmem:[#allocation2 + $0x5d0] sm:$0xff]
    %v249 = vld [vmem:[#allocation2 + $0x5d8] sm:$0xff]
    %v250 = vld [vmem:[#allocation2 + $0x5e0] sm:$0xff]
    %v251 = vld [vmem:[#allocation2 + $0x5e8] sm:$0xff]
    %v252 = vld [vmem:[#allocation2 + $0x5f0] sm:$0xff]
    %v253 = vld [vmem:[#allocation2 + $0x5f8] sm:$0xff]
    %v254 = vld [vmem:[#allocation2 + $0x600] sm:$0xff]
    %v255 = vld [vmem:[#allocation2 + $0x608] sm:$0xff]
    %v256 = vld [vmem:[#allocation2 + $0x610] sm:$0xff]
    %v257 = vld [vmem:[#allocation2 + $0x618] sm:$0xff]
    %v258 = vld [vmem:[#allocation2 + $0x620] sm:$0xff]
    %v259 = vld [vmem:[#allocation2 + $0x628] sm:$0xff]
    %v260 = vld [vmem:[#allocation2 + $0x630] sm:$0xff]
    %v261 = vld [vmem:[#allocation2 + $0x638] sm:$0xff]
    %v262 = vld [vmem:[#allocation2 + $0x640] sm:$0xff]
    %v263 = vld [vmem:[#allocation2 + $0x648] sm:$0xff]
    %v264 = vld [vmem:[#allocation2 + $0x650] sm:$0xff]
    %v265 = vld [vmem:[#allocation2 + $0x658] sm:$0xff]
    %v266 = vld [vmem:[#allocation2 + $0x660] sm:$0xff]
    %v267 = vld [vmem:[#allocation2 + $0x668] sm:$0xff]
    %v268 = vld [vmem:[#allocation2 + $0x670] sm:$0xff]
    %v269 = vld [vmem:[#allocation2 + $0x678] sm:$0xff]
    %v270 = vld [vmem:[#allocation2 + $0x680] sm:$0xff]
    %v271 = vld [vmem:[#allocation2 + $0x688] sm:$0xff]
    %v272 = vld [vmem:[#allocation2 + $0x690] sm:$0xff]
    %v273 = vld [vmem:[#allocation2 + $0x698] sm:$0xff]
    %v274 = vld [vmem:[#allocation2 + $0x6a0] sm:$0xff]
    %v275 = vld [vmem:[#allocation2 + $0x6a8] sm:$0xff]
    %v276 = vld [vmem:[#allocation2 + $0x6b0] sm:$0xff]
    %v277 = vld [vmem:[#allocation2 + $0x6b8] sm:$0xff]
    %v278 = vld [vmem:[#allocation2 + $0x6c0] sm:$0xff]
    %v279 = vld [vmem:[#allocation2 + $0x6c8] sm:$0xff]
    %v280 = vld [vmem:[#allocation2 + $0x6d0] sm:$0xff]
    %v281 = vld [vmem:[#allocation2 + $0x6d8] sm:$0xff]
    %v282 = vld [vmem:[#allocation2 + $0x6e0] sm:$0xff]
    %v283 = vld [vmem:[#allocation2 + $0x6e8] sm:$0xff]
    %v284 = vld [vmem:[#allocation2 + $0x6f0] sm:$0xff]
    %v285 = vld [vmem:[#allocation2 + $0x6f8] sm:$0xff]
    %v286 = vld [vmem:[#allocation2 + $0x700] sm:$0xff]
    %v287 = vld [vmem:[#allocation2 + $0x708] sm:$0xff]
    %v288 = vld [vmem:[#allocation2 + $0x710] sm:$0xff]
    %v289 = vld [vmem:[#allocation2 + $0x718] sm:$0xff]
    %v290 = vld [vmem:[#allocation2 + $0x720] sm:$0xff]
    %v291 = vld [vmem:[#allocation2 + $0x728] sm:$0xff]
    %v292 = vld [vmem:[#allocation2 + $0x730] sm:$0xff]
    %v293 = vld [vmem:[#allocation2 + $0x738] sm:$0xff]
    %v294 = vld [vmem:[#allocation2 + $0x740] sm:$0xff]
    %v295 = vld [vmem:[#allocation2 + $0x748] sm:$0xff]
    %v296 = vld [vmem:[#allocation2 + $0x750] sm:$0xff]
    %v297 = vld [vmem:[#allocation2 + $0x758] sm:$0xff]
    %v298 = vld [vmem:[#allocation2 + $0x760] sm:$0xff]
    %v299 = vld [vmem:[#allocation2 + $0x768] sm:$0xff]
    %v300 = vld [vmem:[#allocation2 + $0x770] sm:$0xff]
    %v301 = vld [vmem:[#allocation2 + $0x778] sm:$0xff]
    %v302 = vld [vmem:[#allocation2 + $0x780] sm:$0xff]
    %v303 = vld [vmem:[#allocation2 + $0x788] sm:$0xff]
    %v304 = vld [vmem:[#allocation2 + $0x790] sm:$0xff]
    %v305 = vld [vmem:[#allocation2 + $0x798] sm:$0xff]
    %v306 = vld [vmem:[#allocation2 + $0x7a0] sm:$0xff]
    %v307 = vld [vmem:[#allocation2 + $0x7a8] sm:$0xff]
    %v308 = vld [vmem:[#allocation2 + $0x7b0] sm:$0xff]
    %v309 = vld [vmem:[#allocation2 + $0x7b8] sm:$0xff]
    %v310 = vld [vmem:[#allocation2 + $0x7c0] sm:$0xff]
    %v311 = vld [vmem:[#allocation2 + $0x7c8] sm:$0xff]
    %v312 = vld [vmem:[#allocation2 + $0x7d0] sm:$0xff]
    %v313 = vld [vmem:[#allocation2 + $0x7d8] sm:$0xff]
    %v314 = vld [vmem:[#allocation2 + $0x7e0] sm:$0xff]
    %v315 = vld [vmem:[#allocation2 + $0x7e8] sm:$0xff]
    %v316 = vld [vmem:[#allocation2 + $0x7f0] sm:$0xff]
    %v317 = vld [vmem:[#allocation2 + $0x7f8] sm:$0xff]
    %v318 = vld [vmem:[#allocation5] sm:$0xff]
    %v319 = vld [vmem:[#allocation5 + $0x8] sm:$0xff]
    %v320 = vld [vmem:[#allocation5 + $0x10] sm:$0xff]
    %v321 = vld [vmem:[#allocation5 + $0x18] sm:$0xff]
    %v322 = vld [vmem:[#allocation5 + $0x20] sm:$0xff]
    %v323 = vld [vmem:[#allocation5 + $0x28] sm:$0xff]
    %v324 = vld [vmem:[#allocation5 + $0x30] sm:$0xff]
    %v325 = vld [vmem:[#allocation5 + $0x38] sm:$0xff]
    %v326 = vld [vmem:[#allocation5 + $0x40] sm:$0xff]
    %v327 = vld [vmem:[#allocation5 + $0x48] sm:$0xff]
    %v328 = vld [vmem:[#allocation5 + $0x50] sm:$0xff]
    %v329 = vld [vmem:[#allocation5 + $0x58] sm:$0xff]
    %v330 = vld [vmem:[#allocation5 + $0x60] sm:$0xff]
    %v331 = vld [vmem:[#allocation5 + $0x68] sm:$0xff]
    %v332 = vld [vmem:[#allocation5 + $0x70] sm:$0xff]
    %v333 = vld [vmem:[#allocation5 + $0x78] sm:$0xff]
    %v334 = vld [vmem:[%s2] sm:$0x1]
    %v336 = vlaneseq
    %v337 = vshrl.u32 %v336, 7
    %v338 = vsub.s32 0, %v337
    %v339 = vrot.slane %v334, %v338
    %341 = vmatprep.subr.mxu0 0.0
    %342 = vmatpush1.msra.mxu0 %v333
    %343 = vmatprep.subr.mxu0 0.0
    %344 = vmatpush1.msra.mxu0 %v332
    %345 = vmatprep.subr.mxu0 0.0
    %346 = vmatpush1.msra.mxu0 %v331
    %347 = vmatprep.subr.mxu0 0.0
    %348 = vmatpush1.msra.mxu0 %v330
    %349 = vmatprep.subr.mxu0 0.0
    %350 = vmatpush1.msra.mxu0 %v329
    %351 = vmatprep.subr.mxu0 0.0
    %352 = vmatpush1.msra.mxu0 %v328
    %353 = vmatprep.subr.mxu0 0.0
    %354 = vmatpush1.msra.mxu0 %v327
    %355 = vmatprep.subr.mxu0 0.0
    %356 = vmatpush1.msra.mxu0 %v326
    %357 = vmatprep.subr.mxu0 0.0
    %358 = vmatpush1.msra.mxu0 %v325
    %359 = vmatprep.subr.mxu0 0.0
    %360 = vmatpush1.msra.mxu0 %v324
    %361 = vmatprep.subr.mxu0 0.0
    %362 = vmatpush1.msra.mxu0 %v323
    %363 = vmatprep.subr.mxu0 0.0
    %364 = vmatpush1.msra.mxu0 %v322
    %365 = vmatprep.subr.mxu0 0.0
    %366 = vmatpush1.msra.mxu0 %v321
    %367 = vmatprep.subr.mxu0 0.0
    %368 = vmatpush1.msra.mxu0 %v320
    %369 = vmatprep.subr.mxu0 0.0
    %370 = vmatpush1.msra.mxu0 %v319
    %371 = vmatprep.subr.mxu0 0.0
    %372 = vmatpush1.msra.mxu0 %v318
    %373 = vmatprep.subr.mxu0 0.0
    %374 = vmatpush2.msra.mxu0 0.0
    %375 = vmatprep.subr.mxu0 0.0
    %376 = vmatpush2.msra.mxu0 0.0
    %377 = vmatprep.subr.mxu0 0.0
    %378 = vmatpush2.msra.mxu0 0.0
    %379 = vmatprep.subr.mxu0 0.0
    %380 = vmatpush2.msra.mxu0 0.0
    %381 = vmatprep.subr.mxu0 0.0
    %382 = vmatpush2.msra.mxu0 0.0
    %383 = vmatprep.subr.mxu0 0.0
    %384 = vmatpush2.msra.mxu0 0.0
    %385 = vmatprep.subr.mxu0 0.0
    %386 = vmatpush2.msra.mxu0 0.0
    %387 = vmatprep.subr.mxu0 0.0
    %388 = vmatpush2.msra.mxu0 0.0
    %389 = vmatprep.subr.mxu0 0.0
    %390 = vmatpush2.msra.mxu0 0.0
    %391 = vmatprep.subr.mxu0 0.0
    %392 = vmatpush2.msra.mxu0 0.0
    %393 = vmatprep.subr.mxu0 0.0
    %394 = vmatpush2.msra.mxu0 0.0
    %395 = vmatprep.subr.mxu0 0.0
    %396 = vmatpush2.msra.mxu0 0.0
    %397 = vmatprep.subr.mxu0 0.0
    %398 = vmatpush2.msra.mxu0 0.0
    %399 = vmatprep.subr.mxu0 0.0
    %400 = vmatpush2.msra.mxu0 0.0
    %401 = vmatprep.subr.mxu0 0.0
    %402 = vmatpush2.msra.mxu0 0.0
    %403 = vmatprep.subr.mxu0 0.0
    %404 = vmatpush2.msra.mxu0 0.0
    %405 = vmatprep.mubr.f32.mxu0 0.0
    %406 = vmatmul.mubr.f32.gmra.mxu0 %v62
    %v407 = vpop.f32.mrf.mxu0
    %v408 = vadd.f32 %v339, %v407
    %v409 = vpop.f32.mrf.mxu0
    %410 = vmatprep.mubr.f32.mxu0 0.0
    %411 = vmatmul.mubr.f32.gmra.mxu0 %v63
    %v412 = vpop.f32.mrf.mxu0
    %v413 = vadd.f32 %v339, %v412
    %v414 = vpop.f32.mrf.mxu0
    %415 = vmatprep.mubr.f32.mxu0 0.0
    %416 = vmatmul.mubr.f32.gmra.mxu0 %v64
    %v417 = vpop.f32.mrf.mxu0
    %v418 = vadd.f32 %v339, %v417
    %v419 = vpop.f32.mrf.mxu0
    %420 = vmatprep.mubr.f32.mxu0 0.0
    %421 = vmatmul.mubr.f32.gmra.mxu0 %v65
    %v422 = vpop.f32.mrf.mxu0
    %v423 = vadd.f32 %v339, %v422
    %v424 = vpop.f32.mrf.mxu0
    %425 = vmatprep.mubr.f32.mxu0 0.0
    %426 = vmatmul.mubr.f32.gmra.mxu0 %v66
    %v427 = vpop.f32.mrf.mxu0
    %v428 = vadd.f32 %v339, %v427
    %v429 = vpop.f32.mrf.mxu0
    %430 = vmatprep.mubr.f32.mxu0 0.0
    %431 = vmatmul.mubr.f32.gmra.mxu0 %v67
    %v432 = vpop.f32.mrf.mxu0
    %v433 = vadd.f32 %v339, %v432
    %v434 = vpop.f32.mrf.mxu0
    %435 = vmatprep.mubr.f32.mxu0 0.0
    %436 = vmatmul.mubr.f32.gmra.mxu0 %v68
    %v437 = vpop.f32.mrf.mxu0
    %v438 = vadd.f32 %v339, %v437
    %v439 = vpop.f32.mrf.mxu0
    %440 = vmatprep.mubr.f32.mxu0 0.0
    %441 = vmatmul.mubr.f32.gmra.mxu0 %v69
    %v442 = vpop.f32.mrf.mxu0
    %v443 = vadd.f32 %v339, %v442
    %v444 = vpop.f32.mrf.mxu0
    %445 = vmatprep.mubr.f32.mxu0 0.0
    %446 = vmatmul.mubr.f32.gmra.mxu0 %v70
    %v447 = vpop.f32.mrf.mxu0
    %v448 = vadd.f32 %v339, %v447
    %v449 = vpop.f32.mrf.mxu0
    %450 = vmatprep.mubr.f32.mxu0 0.0
    %451 = vmatmul.mubr.f32.gmra.mxu0 %v71
    %v452 = vpop.f32.mrf.mxu0
    %v453 = vadd.f32 %v339, %v452
    %v454 = vpop.f32.mrf.mxu0
    %455 = vmatprep.mubr.f32.mxu0 0.0
    %456 = vmatmul.mubr.f32.gmra.mxu0 %v72
    %v457 = vpop.f32.mrf.mxu0
    %v458 = vadd.f32 %v339, %v457
    %v459 = vpop.f32.mrf.mxu0
    %460 = vmatprep.mubr.f32.mxu0 0.0
    %461 = vmatmul.mubr.f32.gmra.mxu0 %v73
    %v462 = vpop.f32.mrf.mxu0
    %v463 = vadd.f32 %v339, %v462
    %v464 = vpop.f32.mrf.mxu0
    %465 = vmatprep.mubr.f32.mxu0 0.0
    %466 = vmatmul.mubr.f32.gmra.mxu0 %v74
    %v467 = vpop.f32.mrf.mxu0
    %v468 = vadd.f32 %v339, %v467
    %v469 = vpop.f32.mrf.mxu0
    %470 = vmatprep.mubr.f32.mxu0 0.0
    %471 = vmatmul.mubr.f32.gmra.mxu0 %v75
    %v472 = vpop.f32.mrf.mxu0
    %v473 = vadd.f32 %v339, %v472
    %v474 = vpop.f32.mrf.mxu0
    %475 = vmatprep.mubr.f32.mxu0 0.0
    %476 = vmatmul.mubr.f32.gmra.mxu0 %v76
    %v477 = vpop.f32.mrf.mxu0
    %v478 = vadd.f32 %v339, %v477
    %v479 = vpop.f32.mrf.mxu0
    %480 = vmatprep.mubr.f32.mxu0 0.0
    %481 = vmatmul.mubr.f32.gmra.mxu0 %v77
    %v482 = vpop.f32.mrf.mxu0
    %v483 = vadd.f32 %v339, %v482
    %v484 = vpop.f32.mrf.mxu0
    %485 = vmatprep.mubr.f32.mxu0 0.0
    %486 = vmatmul.mubr.f32.gmra.mxu0 %v78
    %v487 = vpop.f32.mrf.mxu0
    %v488 = vadd.f32 %v339, %v487
    %v489 = vpop.f32.mrf.mxu0
    %490 = vmatprep.mubr.f32.mxu0 0.0
    %491 = vmatmul.mubr.f32.gmra.mxu0 %v79
    %v492 = vpop.f32.mrf.mxu0
    %v493 = vadd.f32 %v339, %v492
    %v494 = vpop.f32.mrf.mxu0
    %495 = vmatprep.mubr.f32.mxu0 0.0
    %496 = vmatmul.mubr.f32.gmra.mxu0 %v80
    %v497 = vpop.f32.mrf.mxu0
    %v498 = vadd.f32 %v339, %v497
    %v499 = vpop.f32.mrf.mxu0
    %500 = vmatprep.mubr.f32.mxu0 0.0
    %501 = vmatmul.mubr.f32.gmra.mxu0 %v81
    %v502 = vpop.f32.mrf.mxu0
    %v503 = vadd.f32 %v339, %v502
    %v504 = vpop.f32.mrf.mxu0
    %505 = vmatprep.mubr.f32.mxu0 0.0
    %506 = vmatmul.mubr.f32.gmra.mxu0 %v82
    %v507 = vpop.f32.mrf.mxu0
    %v508 = vadd.f32 %v339, %v507
    %v509 = vpop.f32.mrf.mxu0
    %510 = vmatprep.mubr.f32.mxu0 0.0
    %511 = vmatmul.mubr.f32.gmra.mxu0 %v83
    %v512 = vpop.f32.mrf.mxu0
    %v513 = vadd.f32 %v339, %v512
    %v514 = vpop.f32.mrf.mxu0
    %515 = vmatprep.mubr.f32.mxu0 0.0
    %516 = vmatmul.mubr.f32.gmra.mxu0 %v84
    %v517 = vpop.f32.mrf.mxu0
    %v518 = vadd.f32 %v339, %v517
    %v519 = vpop.f32.mrf.mxu0
    %520 = vmatprep.mubr.f32.mxu0 0.0
    %521 = vmatmul.mubr.f32.gmra.mxu0 %v85
    %v522 = vpop.f32.mrf.mxu0
    %v523 = vadd.f32 %v339, %v522
    %v524 = vpop.f32.mrf.mxu0
    %525 = vmatprep.mubr.f32.mxu0 0.0
    %526 = vmatmul.mubr.f32.gmra.mxu0 %v86
    %v527 = vpop.f32.mrf.mxu0
    %v528 = vadd.f32 %v339, %v527
    %v529 = vpop.f32.mrf.mxu0
    %530 = vmatprep.mubr.f32.mxu0 0.0
    %531 = vmatmul.mubr.f32.gmra.mxu0 %v87
    %v532 = vpop.f32.mrf.mxu0
    %v533 = vadd.f32 %v339, %v532
    %v534 = vpop.f32.mrf.mxu0
    %535 = vmatprep.mubr.f32.mxu0 0.0
    %536 = vmatmul.mubr.f32.gmra.mxu0 %v88
    %v537 = vpop.f32.mrf.mxu0
    %v538 = vadd.f32 %v339, %v537
    %v539 = vpop.f32.mrf.mxu0
    %540 = vmatprep.mubr.f32.mxu0 0.0
    %541 = vmatmul.mubr.f32.gmra.mxu0 %v89
    %v542 = vpop.f32.mrf.mxu0
    %v543 = vadd.f32 %v339, %v542
    %v544 = vpop.f32.mrf.mxu0
    %545 = vmatprep.mubr.f32.mxu0 0.0
    %546 = vmatmul.mubr.f32.gmra.mxu0 %v90
    %v547 = vpop.f32.mrf.mxu0
    %v548 = vadd.f32 %v339, %v547
    %v549 = vpop.f32.mrf.mxu0
    %550 = vmatprep.mubr.f32.mxu0 0.0
    %551 = vmatmul.mubr.f32.gmra.mxu0 %v91
    %v552 = vpop.f32.mrf.mxu0
    %v553 = vadd.f32 %v339, %v552
    %v554 = vpop.f32.mrf.mxu0
    %555 = vmatprep.mubr.f32.mxu0 0.0
    %556 = vmatmul.mubr.f32.gmra.mxu0 %v92
    %v557 = vpop.f32.mrf.mxu0
    %v558 = vadd.f32 %v339, %v557
    %v559 = vpop.f32.mrf.mxu0
    %560 = vmatprep.mubr.f32.mxu0 0.0
    %561 = vmatmul.mubr.f32.gmra.mxu0 %v93
    %v562 = vpop.f32.mrf.mxu0
    %v563 = vadd.f32 %v339, %v562
    %v564 = vpop.f32.mrf.mxu0
    %565 = vmatprep.mubr.f32.mxu0 0.0
    %566 = vmatmul.mubr.f32.gmra.mxu0 %v94
    %v567 = vpop.f32.mrf.mxu0
    %v568 = vadd.f32 %v339, %v567
    %v569 = vpop.f32.mrf.mxu0
    %570 = vmatprep.mubr.f32.mxu0 0.0
    %571 = vmatmul.mubr.f32.gmra.mxu0 %v95
    %v572 = vpop.f32.mrf.mxu0
    %v573 = vadd.f32 %v339, %v572
    %v574 = vpop.f32.mrf.mxu0
    %575 = vmatprep.mubr.f32.mxu0 0.0
    %576 = vmatmul.mubr.f32.gmra.mxu0 %v96
    %v577 = vpop.f32.mrf.mxu0
    %v578 = vadd.f32 %v339, %v577
    %v579 = vpop.f32.mrf.mxu0
    %580 = vmatprep.mubr.f32.mxu0 0.0
    %581 = vmatmul.mubr.f32.gmra.mxu0 %v97
    %v582 = vpop.f32.mrf.mxu0
    %v583 = vadd.f32 %v339, %v582
    %v584 = vpop.f32.mrf.mxu0
    %585 = vmatprep.mubr.f32.mxu0 0.0
    %586 = vmatmul.mubr.f32.gmra.mxu0 %v98
    %v587 = vpop.f32.mrf.mxu0
    %v588 = vadd.f32 %v339, %v587
    %v589 = vpop.f32.mrf.mxu0
    %590 = vmatprep.mubr.f32.mxu0 0.0
    %591 = vmatmul.mubr.f32.gmra.mxu0 %v99
    %v592 = vpop.f32.mrf.mxu0
    %v593 = vadd.f32 %v339, %v592
    %v594 = vpop.f32.mrf.mxu0
    %595 = vmatprep.mubr.f32.mxu0 0.0
    %596 = vmatmul.mubr.f32.gmra.mxu0 %v100
    %v597 = vpop.f32.mrf.mxu0
    %v598 = vadd.f32 %v339, %v597
    %v599 = vpop.f32.mrf.mxu0
    %600 = vmatprep.mubr.f32.mxu0 0.0
    %601 = vmatmul.mubr.f32.gmra.mxu0 %v101
    %v602 = vpop.f32.mrf.mxu0
    %v603 = vadd.f32 %v339, %v602
    %v604 = vpop.f32.mrf.mxu0
    %605 = vmatprep.mubr.f32.mxu0 0.0
    %606 = vmatmul.mubr.f32.gmra.mxu0 %v102
    %v607 = vpop.f32.mrf.mxu0
    %v608 = vadd.f32 %v339, %v607
    %v609 = vpop.f32.mrf.mxu0
    %610 = vmatprep.mubr.f32.mxu0 0.0
    %611 = vmatmul.mubr.f32.gmra.mxu0 %v103
    %v612 = vpop.f32.mrf.mxu0
    %v613 = vadd.f32 %v339, %v612
    %v614 = vpop.f32.mrf.mxu0
    %615 = vmatprep.mubr.f32.mxu0 0.0
    %616 = vmatmul.mubr.f32.gmra.mxu0 %v104
    %v617 = vpop.f32.mrf.mxu0
    %v618 = vadd.f32 %v339, %v617
    %v619 = vpop.f32.mrf.mxu0
    %620 = vmatprep.mubr.f32.mxu0 0.0
    %621 = vmatmul.mubr.f32.gmra.mxu0 %v105
    %v622 = vpop.f32.mrf.mxu0
    %v623 = vadd.f32 %v339, %v622
    %v624 = vpop.f32.mrf.mxu0
    %625 = vmatprep.mubr.f32.mxu0 0.0
    %626 = vmatmul.mubr.f32.gmra.mxu0 %v106
    %v627 = vpop.f32.mrf.mxu0
    %v628 = vadd.f32 %v339, %v627
    %v629 = vpop.f32.mrf.mxu0
    %630 = vmatprep.mubr.f32.mxu0 0.0
    %631 = vmatmul.mubr.f32.gmra.mxu0 %v107
    %v632 = vpop.f32.mrf.mxu0
    %v633 = vadd.f32 %v339, %v632
    %v634 = vpop.f32.mrf.mxu0
    %635 = vmatprep.mubr.f32.mxu0 0.0
    %636 = vmatmul.mubr.f32.gmra.mxu0 %v108
    %v637 = vpop.f32.mrf.mxu0
    %v638 = vadd.f32 %v339, %v637
    %v639 = vpop.f32.mrf.mxu0
    %640 = vmatprep.mubr.f32.mxu0 0.0
    %641 = vmatmul.mubr.f32.gmra.mxu0 %v109
    %v642 = vpop.f32.mrf.mxu0
    %v643 = vadd.f32 %v339, %v642
    %v644 = vpop.f32.mrf.mxu0
    %645 = vmatprep.mubr.f32.mxu0 0.0
    %646 = vmatmul.mubr.f32.gmra.mxu0 %v110
    %v647 = vpop.f32.mrf.mxu0
    %v648 = vadd.f32 %v339, %v647
    %v649 = vpop.f32.mrf.mxu0
    %650 = vmatprep.mubr.f32.mxu0 0.0
    %651 = vmatmul.mubr.f32.gmra.mxu0 %v111
    %v652 = vpop.f32.mrf.mxu0
    %v653 = vadd.f32 %v339, %v652
    %v654 = vpop.f32.mrf.mxu0
    %655 = vmatprep.mubr.f32.mxu0 0.0
    %656 = vmatmul.mubr.f32.gmra.mxu0 %v112
    %v657 = vpop.f32.mrf.mxu0
    %v658 = vadd.f32 %v339, %v657
    %v659 = vpop.f32.mrf.mxu0
    %660 = vmatprep.mubr.f32.mxu0 0.0
    %661 = vmatmul.mubr.f32.gmra.mxu0 %v113
    %v662 = vpop.f32.mrf.mxu0
    %v663 = vadd.f32 %v339, %v662
    %v664 = vpop.f32.mrf.mxu0
    %665 = vmatprep.mubr.f32.mxu0 0.0
    %666 = vmatmul.mubr.f32.gmra.mxu0 %v114
    %v667 = vpop.f32.mrf.mxu0
    %v668 = vadd.f32 %v339, %v667
    %v669 = vpop.f32.mrf.mxu0
    %670 = vmatprep.mubr.f32.mxu0 0.0
    %671 = vmatmul.mubr.f32.gmra.mxu0 %v115
    %v672 = vpop.f32.mrf.mxu0
    %v673 = vadd.f32 %v339, %v672
    %v674 = vpop.f32.mrf.mxu0
    %675 = vmatprep.mubr.f32.mxu0 0.0
    %676 = vmatmul.mubr.f32.gmra.mxu0 %v116
    %v677 = vpop.f32.mrf.mxu0
    %v678 = vadd.f32 %v339, %v677
    %v679 = vpop.f32.mrf.mxu0
    %680 = vmatprep.mubr.f32.mxu0 0.0
    %681 = vmatmul.mubr.f32.gmra.mxu0 %v117
    %v682 = vpop.f32.mrf.mxu0
    %v683 = vadd.f32 %v339, %v682
    %v684 = vpop.f32.mrf.mxu0
    %685 = vmatprep.mubr.f32.mxu0 0.0
    %686 = vmatmul.mubr.f32.gmra.mxu0 %v118
    %v687 = vpop.f32.mrf.mxu0
    %v688 = vadd.f32 %v339, %v687
    %v689 = vpop.f32.mrf.mxu0
    %690 = vmatprep.mubr.f32.mxu0 0.0
    %691 = vmatmul.mubr.f32.gmra.mxu0 %v119
    %v692 = vpop.f32.mrf.mxu0
    %v693 = vadd.f32 %v339, %v692
    %v694 = vpop.f32.mrf.mxu0
    %695 = vmatprep.mubr.f32.mxu0 0.0
    %696 = vmatmul.mubr.f32.gmra.mxu0 %v120
    %v697 = vpop.f32.mrf.mxu0
    %v698 = vadd.f32 %v339, %v697
    %v699 = vpop.f32.mrf.mxu0
    %700 = vmatprep.mubr.f32.mxu0 0.0
    %701 = vmatmul.mubr.f32.gmra.mxu0 %v121
    %v702 = vpop.f32.mrf.mxu0
    %v703 = vadd.f32 %v339, %v702
    %v704 = vpop.f32.mrf.mxu0
    %705 = vmatprep.mubr.f32.mxu0 0.0
    %706 = vmatmul.mubr.f32.gmra.mxu0 %v122
    %v707 = vpop.f32.mrf.mxu0
    %v708 = vadd.f32 %v339, %v707
    %v709 = vpop.f32.mrf.mxu0
    %710 = vmatprep.mubr.f32.mxu0 0.0
    %711 = vmatmul.mubr.f32.gmra.mxu0 %v123
    %v712 = vpop.f32.mrf.mxu0
    %v713 = vadd.f32 %v339, %v712
    %v714 = vpop.f32.mrf.mxu0
    %715 = vmatprep.mubr.f32.mxu0 0.0
    %716 = vmatmul.mubr.f32.gmra.mxu0 %v124
    %v717 = vpop.f32.mrf.mxu0
    %v718 = vadd.f32 %v339, %v717
    %v719 = vpop.f32.mrf.mxu0
    %720 = vmatprep.mubr.f32.mxu0 0.0
    %721 = vmatmul.mubr.f32.gmra.mxu0 %v125
    %v722 = vpop.f32.mrf.mxu0
    %v723 = vadd.f32 %v339, %v722
    %v724 = vpop.f32.mrf.mxu0
    %725 = vmatprep.mubr.f32.mxu0 0.0
    %726 = vmatmul.mubr.f32.gmra.mxu0 %v126
    %v727 = vpop.f32.mrf.mxu0
    %v728 = vadd.f32 %v339, %v727
    %v729 = vpop.f32.mrf.mxu0
    %730 = vmatprep.mubr.f32.mxu0 0.0
    %731 = vmatmul.mubr.f32.gmra.mxu0 %v127
    %v732 = vpop.f32.mrf.mxu0
    %v733 = vadd.f32 %v339, %v732
    %v734 = vpop.f32.mrf.mxu0
    %735 = vmatprep.mubr.f32.mxu0 0.0
    %736 = vmatmul.mubr.f32.gmra.mxu0 %v128
    %v737 = vpop.f32.mrf.mxu0
    %v738 = vadd.f32 %v339, %v737
    %v739 = vpop.f32.mrf.mxu0
    %740 = vmatprep.mubr.f32.mxu0 0.0
    %741 = vmatmul.mubr.f32.gmra.mxu0 %v129
    %v742 = vpop.f32.mrf.mxu0
    %v743 = vadd.f32 %v339, %v742
    %v744 = vpop.f32.mrf.mxu0
    %745 = vmatprep.mubr.f32.mxu0 0.0
    %746 = vmatmul.mubr.f32.gmra.mxu0 %v130
    %v747 = vpop.f32.mrf.mxu0
    %v748 = vadd.f32 %v339, %v747
    %v749 = vpop.f32.mrf.mxu0
    %750 = vmatprep.mubr.f32.mxu0 0.0
    %751 = vmatmul.mubr.f32.gmra.mxu0 %v131
    %v752 = vpop.f32.mrf.mxu0
    %v753 = vadd.f32 %v339, %v752
    %v754 = vpop.f32.mrf.mxu0
    %755 = vmatprep.mubr.f32.mxu0 0.0
    %756 = vmatmul.mubr.f32.gmra.mxu0 %v132
    %v757 = vpop.f32.mrf.mxu0
    %v758 = vadd.f32 %v339, %v757
    %v759 = vpop.f32.mrf.mxu0
    %760 = vmatprep.mubr.f32.mxu0 0.0
    %761 = vmatmul.mubr.f32.gmra.mxu0 %v133
    %v762 = vpop.f32.mrf.mxu0
    %v763 = vadd.f32 %v339, %v762
    %v764 = vpop.f32.mrf.mxu0
    %765 = vmatprep.mubr.f32.mxu0 0.0
    %766 = vmatmul.mubr.f32.gmra.mxu0 %v134
    %v767 = vpop.f32.mrf.mxu0
    %v768 = vadd.f32 %v339, %v767
    %v769 = vpop.f32.mrf.mxu0
    %770 = vmatprep.mubr.f32.mxu0 0.0
    %771 = vmatmul.mubr.f32.gmra.mxu0 %v135
    %v772 = vpop.f32.mrf.mxu0
    %v773 = vadd.f32 %v339, %v772
    %v774 = vpop.f32.mrf.mxu0
    %775 = vmatprep.mubr.f32.mxu0 0.0
    %776 = vmatmul.mubr.f32.gmra.mxu0 %v136
    %v777 = vpop.f32.mrf.mxu0
    %v778 = vadd.f32 %v339, %v777
    %v779 = vpop.f32.mrf.mxu0
    %780 = vmatprep.mubr.f32.mxu0 0.0
    %781 = vmatmul.mubr.f32.gmra.mxu0 %v137
    %v782 = vpop.f32.mrf.mxu0
    %v783 = vadd.f32 %v339, %v782
    %v784 = vpop.f32.mrf.mxu0
    %785 = vmatprep.mubr.f32.mxu0 0.0
    %786 = vmatmul.mubr.f32.gmra.mxu0 %v138
    %v787 = vpop.f32.mrf.mxu0
    %v788 = vadd.f32 %v339, %v787
    %v789 = vpop.f32.mrf.mxu0
    %790 = vmatprep.mubr.f32.mxu0 0.0
    %791 = vmatmul.mubr.f32.gmra.mxu0 %v139
    %v792 = vpop.f32.mrf.mxu0
    %v793 = vadd.f32 %v339, %v792
    %v794 = vpop.f32.mrf.mxu0
    %795 = vmatprep.mubr.f32.mxu0 0.0
    %796 = vmatmul.mubr.f32.gmra.mxu0 %v140
    %v797 = vpop.f32.mrf.mxu0
    %v798 = vadd.f32 %v339, %v797
    %v799 = vpop.f32.mrf.mxu0
    %800 = vmatprep.mubr.f32.mxu0 0.0
    %801 = vmatmul.mubr.f32.gmra.mxu0 %v141
    %v802 = vpop.f32.mrf.mxu0
    %v803 = vadd.f32 %v339, %v802
    %v804 = vpop.f32.mrf.mxu0
    %805 = vmatprep.mubr.f32.mxu0 0.0
    %806 = vmatmul.mubr.f32.gmra.mxu0 %v142
    %v807 = vpop.f32.mrf.mxu0
    %v808 = vadd.f32 %v339, %v807
    %v809 = vpop.f32.mrf.mxu0
    %810 = vmatprep.mubr.f32.mxu0 0.0
    %811 = vmatmul.mubr.f32.gmra.mxu0 %v143
    %v812 = vpop.f32.mrf.mxu0
    %v813 = vadd.f32 %v339, %v812
    %v814 = vpop.f32.mrf.mxu0
    %815 = vmatprep.mubr.f32.mxu0 0.0
    %816 = vmatmul.mubr.f32.gmra.mxu0 %v144
    %v817 = vpop.f32.mrf.mxu0
    %v818 = vadd.f32 %v339, %v817
    %v819 = vpop.f32.mrf.mxu0
    %820 = vmatprep.mubr.f32.mxu0 0.0
    %821 = vmatmul.mubr.f32.gmra.mxu0 %v145
    %v822 = vpop.f32.mrf.mxu0
    %v823 = vadd.f32 %v339, %v822
    %v824 = vpop.f32.mrf.mxu0
    %825 = vmatprep.mubr.f32.mxu0 0.0
    %826 = vmatmul.mubr.f32.gmra.mxu0 %v146
    %v827 = vpop.f32.mrf.mxu0
    %v828 = vadd.f32 %v339, %v827
    %v829 = vpop.f32.mrf.mxu0
    %830 = vmatprep.mubr.f32.mxu0 0.0
    %831 = vmatmul.mubr.f32.gmra.mxu0 %v147
    %v832 = vpop.f32.mrf.mxu0
    %v833 = vadd.f32 %v339, %v832
    %v834 = vpop.f32.mrf.mxu0
    %835 = vmatprep.mubr.f32.mxu0 0.0
    %836 = vmatmul.mubr.f32.gmra.mxu0 %v148
    %v837 = vpop.f32.mrf.mxu0
    %v838 = vadd.f32 %v339, %v837
    %v839 = vpop.f32.mrf.mxu0
    %840 = vmatprep.mubr.f32.mxu0 0.0
    %841 = vmatmul.mubr.f32.gmra.mxu0 %v149
    %v842 = vpop.f32.mrf.mxu0
    %v843 = vadd.f32 %v339, %v842
    %v844 = vpop.f32.mrf.mxu0
    %845 = vmatprep.mubr.f32.mxu0 0.0
    %846 = vmatmul.mubr.f32.gmra.mxu0 %v150
    %v847 = vpop.f32.mrf.mxu0
    %v848 = vadd.f32 %v339, %v847
    %v849 = vpop.f32.mrf.mxu0
    %850 = vmatprep.mubr.f32.mxu0 0.0
    %851 = vmatmul.mubr.f32.gmra.mxu0 %v151
    %v852 = vpop.f32.mrf.mxu0
    %v853 = vadd.f32 %v339, %v852
    %v854 = vpop.f32.mrf.mxu0
    %855 = vmatprep.mubr.f32.mxu0 0.0
    %856 = vmatmul.mubr.f32.gmra.mxu0 %v152
    %v857 = vpop.f32.mrf.mxu0
    %v858 = vadd.f32 %v339, %v857
    %v859 = vpop.f32.mrf.mxu0
    %860 = vmatprep.mubr.f32.mxu0 0.0
    %861 = vmatmul.mubr.f32.gmra.mxu0 %v153
    %v862 = vpop.f32.mrf.mxu0
    %v863 = vadd.f32 %v339, %v862
    %v864 = vpop.f32.mrf.mxu0
    %865 = vmatprep.mubr.f32.mxu0 0.0
    %866 = vmatmul.mubr.f32.gmra.mxu0 %v154
    %v867 = vpop.f32.mrf.mxu0
    %v868 = vadd.f32 %v339, %v867
    %v869 = vpop.f32.mrf.mxu0
    %870 = vmatprep.mubr.f32.mxu0 0.0
    %871 = vmatmul.mubr.f32.gmra.mxu0 %v155
    %v872 = vpop.f32.mrf.mxu0
    %v873 = vadd.f32 %v339, %v872
    %v874 = vpop.f32.mrf.mxu0
    %875 = vmatprep.mubr.f32.mxu0 0.0
    %876 = vmatmul.mubr.f32.gmra.mxu0 %v156
    %v877 = vpop.f32.mrf.mxu0
    %v878 = vadd.f32 %v339, %v877
    %v879 = vpop.f32.mrf.mxu0
    %880 = vmatprep.mubr.f32.mxu0 0.0
    %881 = vmatmul.mubr.f32.gmra.mxu0 %v157
    %v882 = vpop.f32.mrf.mxu0
    %v883 = vadd.f32 %v339, %v882
    %v884 = vpop.f32.mrf.mxu0
    %885 = vmatprep.mubr.f32.mxu0 0.0
    %886 = vmatmul.mubr.f32.gmra.mxu0 %v158
    %v887 = vpop.f32.mrf.mxu0
    %v888 = vadd.f32 %v339, %v887
    %v889 = vpop.f32.mrf.mxu0
    %890 = vmatprep.mubr.f32.mxu0 0.0
    %891 = vmatmul.mubr.f32.gmra.mxu0 %v159
    %v892 = vpop.f32.mrf.mxu0
    %v893 = vadd.f32 %v339, %v892
    %v894 = vpop.f32.mrf.mxu0
    %895 = vmatprep.mubr.f32.mxu0 0.0
    %896 = vmatmul.mubr.f32.gmra.mxu0 %v160
    %v897 = vpop.f32.mrf.mxu0
    %v898 = vadd.f32 %v339, %v897
    %v899 = vpop.f32.mrf.mxu0
    %900 = vmatprep.mubr.f32.mxu0 0.0
    %901 = vmatmul.mubr.f32.gmra.mxu0 %v161
    %v902 = vpop.f32.mrf.mxu0
    %v903 = vadd.f32 %v339, %v902
    %v904 = vpop.f32.mrf.mxu0
    %905 = vmatprep.mubr.f32.mxu0 0.0
    %906 = vmatmul.mubr.f32.gmra.mxu0 %v162
    %v907 = vpop.f32.mrf.mxu0
    %v908 = vadd.f32 %v339, %v907
    %v909 = vpop.f32.mrf.mxu0
    %910 = vmatprep.mubr.f32.mxu0 0.0
    %911 = vmatmul.mubr.f32.gmra.mxu0 %v163
    %v912 = vpop.f32.mrf.mxu0
    %v913 = vadd.f32 %v339, %v912
    %v914 = vpop.f32.mrf.mxu0
    %915 = vmatprep.mubr.f32.mxu0 0.0
    %916 = vmatmul.mubr.f32.gmra.mxu0 %v164
    %v917 = vpop.f32.mrf.mxu0
    %v918 = vadd.f32 %v339, %v917
    %v919 = vpop.f32.mrf.mxu0
    %920 = vmatprep.mubr.f32.mxu0 0.0
    %921 = vmatmul.mubr.f32.gmra.mxu0 %v165
    %v922 = vpop.f32.mrf.mxu0
    %v923 = vadd.f32 %v339, %v922
    %v924 = vpop.f32.mrf.mxu0
    %925 = vmatprep.mubr.f32.mxu0 0.0
    %926 = vmatmul.mubr.f32.gmra.mxu0 %v166
    %v927 = vpop.f32.mrf.mxu0
    %v928 = vadd.f32 %v339, %v927
    %v929 = vpop.f32.mrf.mxu0
    %930 = vmatprep.mubr.f32.mxu0 0.0
    %931 = vmatmul.mubr.f32.gmra.mxu0 %v167
    %v932 = vpop.f32.mrf.mxu0
    %v933 = vadd.f32 %v339, %v932
    %v934 = vpop.f32.mrf.mxu0
    %935 = vmatprep.mubr.f32.mxu0 0.0
    %936 = vmatmul.mubr.f32.gmra.mxu0 %v168
    %v937 = vpop.f32.mrf.mxu0
    %v938 = vadd.f32 %v339, %v937
    %v939 = vpop.f32.mrf.mxu0
    %940 = vmatprep.mubr.f32.mxu0 0.0
    %941 = vmatmul.mubr.f32.gmra.mxu0 %v169
    %v942 = vpop.f32.mrf.mxu0
    %v943 = vadd.f32 %v339, %v942
    %v944 = vpop.f32.mrf.mxu0
    %945 = vmatprep.mubr.f32.mxu0 0.0
    %946 = vmatmul.mubr.f32.gmra.mxu0 %v170
    %v947 = vpop.f32.mrf.mxu0
    %v948 = vadd.f32 %v339, %v947
    %v949 = vpop.f32.mrf.mxu0
    %950 = vmatprep.mubr.f32.mxu0 0.0
    %951 = vmatmul.mubr.f32.gmra.mxu0 %v171
    %v952 = vpop.f32.mrf.mxu0
    %v953 = vadd.f32 %v339, %v952
    %v954 = vpop.f32.mrf.mxu0
    %955 = vmatprep.mubr.f32.mxu0 0.0
    %956 = vmatmul.mubr.f32.gmra.mxu0 %v172
    %v957 = vpop.f32.mrf.mxu0
    %v958 = vadd.f32 %v339, %v957
    %v959 = vpop.f32.mrf.mxu0
    %960 = vmatprep.mubr.f32.mxu0 0.0
    %961 = vmatmul.mubr.f32.gmra.mxu0 %v173
    %v962 = vpop.f32.mrf.mxu0
    %v963 = vadd.f32 %v339, %v962
    %v964 = vpop.f32.mrf.mxu0
    %965 = vmatprep.mubr.f32.mxu0 0.0
    %966 = vmatmul.mubr.f32.gmra.mxu0 %v174
    %v967 = vpop.f32.mrf.mxu0
    %v968 = vadd.f32 %v339, %v967
    %v969 = vpop.f32.mrf.mxu0
    %970 = vmatprep.mubr.f32.mxu0 0.0
    %971 = vmatmul.mubr.f32.gmra.mxu0 %v175
    %v972 = vpop.f32.mrf.mxu0
    %v973 = vadd.f32 %v339, %v972
    %v974 = vpop.f32.mrf.mxu0
    %975 = vmatprep.mubr.f32.mxu0 0.0
    %976 = vmatmul.mubr.f32.gmra.mxu0 %v176
    %v977 = vpop.f32.mrf.mxu0
    %v978 = vadd.f32 %v339, %v977
    %v979 = vpop.f32.mrf.mxu0
    %980 = vmatprep.mubr.f32.mxu0 0.0
    %981 = vmatmul.mubr.f32.gmra.mxu0 %v177
    %v982 = vpop.f32.mrf.mxu0
    %v983 = vadd.f32 %v339, %v982
    %v984 = vpop.f32.mrf.mxu0
    %985 = vmatprep.mubr.f32.mxu0 0.0
    %986 = vmatmul.mubr.f32.gmra.mxu0 %v178
    %v987 = vpop.f32.mrf.mxu0
    %v988 = vadd.f32 %v339, %v987
    %v989 = vpop.f32.mrf.mxu0
    %990 = vmatprep.mubr.f32.mxu0 0.0
    %991 = vmatmul.mubr.f32.gmra.mxu0 %v179
    %v992 = vpop.f32.mrf.mxu0
    %v993 = vadd.f32 %v339, %v992
    %v994 = vpop.f32.mrf.mxu0
    %995 = vmatprep.mubr.f32.mxu0 0.0
    %996 = vmatmul.mubr.f32.gmra.mxu0 %v180
    %v997 = vpop.f32.mrf.mxu0
    %v998 = vadd.f32 %v339, %v997
    %v999 = vpop.f32.mrf.mxu0
    %1000 = vmatprep.mubr.f32.mxu0 0.0
    %1001 = vmatmul.mubr.f32.gmra.mxu0 %v181
    %v1002 = vpop.f32.mrf.mxu0
    %v1003 = vadd.f32 %v339, %v1002
    %v1004 = vpop.f32.mrf.mxu0
    %1005 = vmatprep.mubr.f32.mxu0 0.0
    %1006 = vmatmul.mubr.f32.gmra.mxu0 %v182
    %v1007 = vpop.f32.mrf.mxu0
    %v1008 = vadd.f32 %v339, %v1007
    %v1009 = vpop.f32.mrf.mxu0
    %1010 = vmatprep.mubr.f32.mxu0 0.0
    %1011 = vmatmul.mubr.f32.gmra.mxu0 %v183
    %v1012 = vpop.f32.mrf.mxu0
    %v1013 = vadd.f32 %v339, %v1012
    %v1014 = vpop.f32.mrf.mxu0
    %1015 = vmatprep.mubr.f32.mxu0 0.0
    %1016 = vmatmul.mubr.f32.gmra.mxu0 %v184
    %v1017 = vpop.f32.mrf.mxu0
    %v1018 = vadd.f32 %v339, %v1017
    %v1019 = vpop.f32.mrf.mxu0
    %1020 = vmatprep.mubr.f32.mxu0 0.0
    %1021 = vmatmul.mubr.f32.gmra.mxu0 %v185
    %v1022 = vpop.f32.mrf.mxu0
    %v1023 = vadd.f32 %v339, %v1022
    %v1024 = vpop.f32.mrf.mxu0
    %1025 = vmatprep.mubr.f32.mxu0 0.0
    %1026 = vmatmul.mubr.f32.gmra.mxu0 %v186
    %v1027 = vpop.f32.mrf.mxu0
    %v1028 = vadd.f32 %v339, %v1027
    %v1029 = vpop.f32.mrf.mxu0
    %1030 = vmatprep.mubr.f32.mxu0 0.0
    %1031 = vmatmul.mubr.f32.gmra.mxu0 %v187
    %v1032 = vpop.f32.mrf.mxu0
    %v1033 = vadd.f32 %v339, %v1032
    %v1034 = vpop.f32.mrf.mxu0
    %1035 = vmatprep.mubr.f32.mxu0 0.0
    %1036 = vmatmul.mubr.f32.gmra.mxu0 %v188
    %v1037 = vpop.f32.mrf.mxu0
    %v1038 = vadd.f32 %v339, %v1037
    %v1039 = vpop.f32.mrf.mxu0
    %1040 = vmatprep.mubr.f32.mxu0 0.0
    %1041 = vmatmul.mubr.f32.gmra.mxu0 %v189
    %v1042 = vpop.f32.mrf.mxu0
    %v1043 = vadd.f32 %v339, %v1042
    %v1044 = vpop.f32.mrf.mxu0
    %1045 = vmatprep.mubr.f32.mxu0 0.0
    %1046 = vmatmul.mubr.f32.gmra.mxu0 %v190
    %v1047 = vpop.f32.mrf.mxu0
    %v1048 = vadd.f32 %v339, %v1047
    %v1049 = vpop.f32.mrf.mxu0
    %1050 = vmatprep.mubr.f32.mxu0 0.0
    %1051 = vmatmul.mubr.f32.gmra.mxu0 %v191
    %v1052 = vpop.f32.mrf.mxu0
    %v1053 = vadd.f32 %v339, %v1052
    %v1054 = vpop.f32.mrf.mxu0
    %1055 = vmatprep.mubr.f32.mxu0 0.0
    %1056 = vmatmul.mubr.f32.gmra.mxu0 %v192
    %v1057 = vpop.f32.mrf.mxu0
    %v1058 = vadd.f32 %v339, %v1057
    %v1059 = vpop.f32.mrf.mxu0
    %1060 = vmatprep.mubr.f32.mxu0 0.0
    %1061 = vmatmul.mubr.f32.gmra.mxu0 %v193
    %v1062 = vpop.f32.mrf.mxu0
    %v1063 = vadd.f32 %v339, %v1062
    %v1064 = vpop.f32.mrf.mxu0
    %1065 = vmatprep.mubr.f32.mxu0 0.0
    %1066 = vmatmul.mubr.f32.gmra.mxu0 %v194
    %v1067 = vpop.f32.mrf.mxu0
    %v1068 = vadd.f32 %v339, %v1067
    %v1069 = vpop.f32.mrf.mxu0
    %1070 = vmatprep.mubr.f32.mxu0 0.0
    %1071 = vmatmul.mubr.f32.gmra.mxu0 %v195
    %v1072 = vpop.f32.mrf.mxu0
    %v1073 = vadd.f32 %v339, %v1072
    %v1074 = vpop.f32.mrf.mxu0
    %1075 = vmatprep.mubr.f32.mxu0 0.0
    %1076 = vmatmul.mubr.f32.gmra.mxu0 %v196
    %v1077 = vpop.f32.mrf.mxu0
    %v1078 = vadd.f32 %v339, %v1077
    %v1079 = vpop.f32.mrf.mxu0
    %1080 = vmatprep.mubr.f32.mxu0 0.0
    %1081 = vmatmul.mubr.f32.gmra.mxu0 %v197
    %v1082 = vpop.f32.mrf.mxu0
    %v1083 = vadd.f32 %v339, %v1082
    %v1084 = vpop.f32.mrf.mxu0
    %1085 = vmatprep.mubr.f32.mxu0 0.0
    %1086 = vmatmul.mubr.f32.gmra.mxu0 %v198
    %v1087 = vpop.f32.mrf.mxu0
    %v1088 = vadd.f32 %v339, %v1087
    %v1089 = vpop.f32.mrf.mxu0
    %1090 = vmatprep.mubr.f32.mxu0 0.0
    %1091 = vmatmul.mubr.f32.gmra.mxu0 %v199
    %v1092 = vpop.f32.mrf.mxu0
    %v1093 = vadd.f32 %v339, %v1092
    %v1094 = vpop.f32.mrf.mxu0
    %1095 = vmatprep.mubr.f32.mxu0 0.0
    %1096 = vmatmul.mubr.f32.gmra.mxu0 %v200
    %v1097 = vpop.f32.mrf.mxu0
    %v1098 = vadd.f32 %v339, %v1097
    %v1099 = vpop.f32.mrf.mxu0
    %1100 = vmatprep.mubr.f32.mxu0 0.0
    %1101 = vmatmul.mubr.f32.gmra.mxu0 %v201
    %v1102 = vpop.f32.mrf.mxu0
    %v1103 = vadd.f32 %v339, %v1102
    %v1104 = vpop.f32.mrf.mxu0
    %1105 = vmatprep.mubr.f32.mxu0 0.0
    %1106 = vmatmul.mubr.f32.gmra.mxu0 %v202
    %v1107 = vpop.f32.mrf.mxu0
    %v1108 = vadd.f32 %v339, %v1107
    %v1109 = vpop.f32.mrf.mxu0
    %1110 = vmatprep.mubr.f32.mxu0 0.0
    %1111 = vmatmul.mubr.f32.gmra.mxu0 %v203
    %v1112 = vpop.f32.mrf.mxu0
    %v1113 = vadd.f32 %v339, %v1112
    %v1114 = vpop.f32.mrf.mxu0
    %1115 = vmatprep.mubr.f32.mxu0 0.0
    %1116 = vmatmul.mubr.f32.gmra.mxu0 %v204
    %v1117 = vpop.f32.mrf.mxu0
    %v1118 = vadd.f32 %v339, %v1117
    %v1119 = vpop.f32.mrf.mxu0
    %1120 = vmatprep.mubr.f32.mxu0 0.0
    %1121 = vmatmul.mubr.f32.gmra.mxu0 %v205
    %v1122 = vpop.f32.mrf.mxu0
    %v1123 = vadd.f32 %v339, %v1122
    %v1124 = vpop.f32.mrf.mxu0
    %1125 = vmatprep.mubr.f32.mxu0 0.0
    %1126 = vmatmul.mubr.f32.gmra.mxu0 %v206
    %v1127 = vpop.f32.mrf.mxu0
    %v1128 = vadd.f32 %v339, %v1127
    %v1129 = vpop.f32.mrf.mxu0
    %1130 = vmatprep.mubr.f32.mxu0 0.0
    %1131 = vmatmul.mubr.f32.gmra.mxu0 %v207
    %v1132 = vpop.f32.mrf.mxu0
    %v1133 = vadd.f32 %v339, %v1132
    %v1134 = vpop.f32.mrf.mxu0
    %1135 = vmatprep.mubr.f32.mxu0 0.0
    %1136 = vmatmul.mubr.f32.gmra.mxu0 %v208
    %v1137 = vpop.f32.mrf.mxu0
    %v1138 = vadd.f32 %v339, %v1137
    %v1139 = vpop.f32.mrf.mxu0
    %1140 = vmatprep.mubr.f32.mxu0 0.0
    %1141 = vmatmul.mubr.f32.gmra.mxu0 %v209
    %v1142 = vpop.f32.mrf.mxu0
    %v1143 = vadd.f32 %v339, %v1142
    %v1144 = vpop.f32.mrf.mxu0
    %1145 = vmatprep.mubr.f32.mxu0 0.0
    %1146 = vmatmul.mubr.f32.gmra.mxu0 %v210
    %v1147 = vpop.f32.mrf.mxu0
    %v1148 = vadd.f32 %v339, %v1147
    %v1149 = vpop.f32.mrf.mxu0
    %1150 = vmatprep.mubr.f32.mxu0 0.0
    %1151 = vmatmul.mubr.f32.gmra.mxu0 %v211
    %v1152 = vpop.f32.mrf.mxu0
    %v1153 = vadd.f32 %v339, %v1152
    %v1154 = vpop.f32.mrf.mxu0
    %1155 = vmatprep.mubr.f32.mxu0 0.0
    %1156 = vmatmul.mubr.f32.gmra.mxu0 %v212
    %v1157 = vpop.f32.mrf.mxu0
    %v1158 = vadd.f32 %v339, %v1157
    %v1159 = vpop.f32.mrf.mxu0
    %1160 = vmatprep.mubr.f32.mxu0 0.0
    %1161 = vmatmul.mubr.f32.gmra.mxu0 %v213
    %v1162 = vpop.f32.mrf.mxu0
    %v1163 = vadd.f32 %v339, %v1162
    %v1164 = vpop.f32.mrf.mxu0
    %1165 = vmatprep.mubr.f32.mxu0 0.0
    %1166 = vmatmul.mubr.f32.gmra.mxu0 %v214
    %v1167 = vpop.f32.mrf.mxu0
    %v1168 = vadd.f32 %v339, %v1167
    %v1169 = vpop.f32.mrf.mxu0
    %1170 = vmatprep.mubr.f32.mxu0 0.0
    %1171 = vmatmul.mubr.f32.gmra.mxu0 %v215
    %v1172 = vpop.f32.mrf.mxu0
    %v1173 = vadd.f32 %v339, %v1172
    %v1174 = vpop.f32.mrf.mxu0
    %1175 = vmatprep.mubr.f32.mxu0 0.0
    %1176 = vmatmul.mubr.f32.gmra.mxu0 %v216
    %v1177 = vpop.f32.mrf.mxu0
    %v1178 = vadd.f32 %v339, %v1177
    %v1179 = vpop.f32.mrf.mxu0
    %1180 = vmatprep.mubr.f32.mxu0 0.0
    %1181 = vmatmul.mubr.f32.gmra.mxu0 %v217
    %v1182 = vpop.f32.mrf.mxu0
    %v1183 = vadd.f32 %v339, %v1182
    %v1184 = vpop.f32.mrf.mxu0
    %1185 = vmatprep.mubr.f32.mxu0 0.0
    %1186 = vmatmul.mubr.f32.gmra.mxu0 %v218
    %v1187 = vpop.f32.mrf.mxu0
    %v1188 = vadd.f32 %v339, %v1187
    %v1189 = vpop.f32.mrf.mxu0
    %1190 = vmatprep.mubr.f32.mxu0 0.0
    %1191 = vmatmul.mubr.f32.gmra.mxu0 %v219
    %v1192 = vpop.f32.mrf.mxu0
    %v1193 = vadd.f32 %v339, %v1192
    %v1194 = vpop.f32.mrf.mxu0
    %1195 = vmatprep.mubr.f32.mxu0 0.0
    %1196 = vmatmul.mubr.f32.gmra.mxu0 %v220
    %v1197 = vpop.f32.mrf.mxu0
    %v1198 = vadd.f32 %v339, %v1197
    %v1199 = vpop.f32.mrf.mxu0
    %1200 = vmatprep.mubr.f32.mxu0 0.0
    %1201 = vmatmul.mubr.f32.gmra.mxu0 %v221
    %v1202 = vpop.f32.mrf.mxu0
    %v1203 = vadd.f32 %v339, %v1202
    %v1204 = vpop.f32.mrf.mxu0
    %1205 = vmatprep.mubr.f32.mxu0 0.0
    %1206 = vmatmul.mubr.f32.gmra.mxu0 %v222
    %v1207 = vpop.f32.mrf.mxu0
    %v1208 = vadd.f32 %v339, %v1207
    %v1209 = vpop.f32.mrf.mxu0
    %1210 = vmatprep.mubr.f32.mxu0 0.0
    %1211 = vmatmul.mubr.f32.gmra.mxu0 %v223
    %v1212 = vpop.f32.mrf.mxu0
    %v1213 = vadd.f32 %v339, %v1212
    %v1214 = vpop.f32.mrf.mxu0
    %1215 = vmatprep.mubr.f32.mxu0 0.0
    %1216 = vmatmul.mubr.f32.gmra.mxu0 %v224
    %v1217 = vpop.f32.mrf.mxu0
    %v1218 = vadd.f32 %v339, %v1217
    %v1219 = vpop.f32.mrf.mxu0
    %1220 = vmatprep.mubr.f32.mxu0 0.0
    %1221 = vmatmul.mubr.f32.gmra.mxu0 %v225
    %v1222 = vpop.f32.mrf.mxu0
    %v1223 = vadd.f32 %v339, %v1222
    %v1224 = vpop.f32.mrf.mxu0
    %1225 = vmatprep.mubr.f32.mxu0 0.0
    %1226 = vmatmul.mubr.f32.gmra.mxu0 %v226
    %v1227 = vpop.f32.mrf.mxu0
    %v1228 = vadd.f32 %v339, %v1227
    %v1229 = vpop.f32.mrf.mxu0
    %1230 = vmatprep.mubr.f32.mxu0 0.0
    %1231 = vmatmul.mubr.f32.gmra.mxu0 %v227
    %v1232 = vpop.f32.mrf.mxu0
    %v1233 = vadd.f32 %v339, %v1232
    %v1234 = vpop.f32.mrf.mxu0
    %1235 = vmatprep.mubr.f32.mxu0 0.0
    %1236 = vmatmul.mubr.f32.gmra.mxu0 %v228
    %v1237 = vpop.f32.mrf.mxu0
    %v1238 = vadd.f32 %v339, %v1237
    %v1239 = vpop.f32.mrf.mxu0
    %1240 = vmatprep.mubr.f32.mxu0 0.0
    %1241 = vmatmul.mubr.f32.gmra.mxu0 %v229
    %v1242 = vpop.f32.mrf.mxu0
    %v1243 = vadd.f32 %v339, %v1242
    %v1244 = vpop.f32.mrf.mxu0
    %1245 = vmatprep.mubr.f32.mxu0 0.0
    %1246 = vmatmul.mubr.f32.gmra.mxu0 %v230
    %v1247 = vpop.f32.mrf.mxu0
    %v1248 = vadd.f32 %v339, %v1247
    %v1249 = vpop.f32.mrf.mxu0
    %1250 = vmatprep.mubr.f32.mxu0 0.0
    %1251 = vmatmul.mubr.f32.gmra.mxu0 %v231
    %v1252 = vpop.f32.mrf.mxu0
    %v1253 = vadd.f32 %v339, %v1252
    %v1254 = vpop.f32.mrf.mxu0
    %1255 = vmatprep.mubr.f32.mxu0 0.0
    %1256 = vmatmul.mubr.f32.gmra.mxu0 %v232
    %v1257 = vpop.f32.mrf.mxu0
    %v1258 = vadd.f32 %v339, %v1257
    %v1259 = vpop.f32.mrf.mxu0
    %1260 = vmatprep.mubr.f32.mxu0 0.0
    %1261 = vmatmul.mubr.f32.gmra.mxu0 %v233
    %v1262 = vpop.f32.mrf.mxu0
    %v1263 = vadd.f32 %v339, %v1262
    %v1264 = vpop.f32.mrf.mxu0
    %1265 = vmatprep.mubr.f32.mxu0 0.0
    %1266 = vmatmul.mubr.f32.gmra.mxu0 %v234
    %v1267 = vpop.f32.mrf.mxu0
    %v1268 = vadd.f32 %v339, %v1267
    %v1269 = vpop.f32.mrf.mxu0
    %1270 = vmatprep.mubr.f32.mxu0 0.0
    %1271 = vmatmul.mubr.f32.gmra.mxu0 %v235
    %v1272 = vpop.f32.mrf.mxu0
    %v1273 = vadd.f32 %v339, %v1272
    %v1274 = vpop.f32.mrf.mxu0
    %1275 = vmatprep.mubr.f32.mxu0 0.0
    %1276 = vmatmul.mubr.f32.gmra.mxu0 %v236
    %v1277 = vpop.f32.mrf.mxu0
    %v1278 = vadd.f32 %v339, %v1277
    %v1279 = vpop.f32.mrf.mxu0
    %1280 = vmatprep.mubr.f32.mxu0 0.0
    %1281 = vmatmul.mubr.f32.gmra.mxu0 %v237
    %v1282 = vpop.f32.mrf.mxu0
    %v1283 = vadd.f32 %v339, %v1282
    %v1284 = vpop.f32.mrf.mxu0
    %1285 = vmatprep.mubr.f32.mxu0 0.0
    %1286 = vmatmul.mubr.f32.gmra.mxu0 %v238
    %v1287 = vpop.f32.mrf.mxu0
    %v1288 = vadd.f32 %v339, %v1287
    %v1289 = vpop.f32.mrf.mxu0
    %1290 = vmatprep.mubr.f32.mxu0 0.0
    %1291 = vmatmul.mubr.f32.gmra.mxu0 %v239
    %v1292 = vpop.f32.mrf.mxu0
    %v1293 = vadd.f32 %v339, %v1292
    %v1294 = vpop.f32.mrf.mxu0
    %1295 = vmatprep.mubr.f32.mxu0 0.0
    %1296 = vmatmul.mubr.f32.gmra.mxu0 %v240
    %v1297 = vpop.f32.mrf.mxu0
    %v1298 = vadd.f32 %v339, %v1297
    %v1299 = vpop.f32.mrf.mxu0
    %1300 = vmatprep.mubr.f32.mxu0 0.0
    %1301 = vmatmul.mubr.f32.gmra.mxu0 %v241
    %v1302 = vpop.f32.mrf.mxu0
    %v1303 = vadd.f32 %v339, %v1302
    %v1304 = vpop.f32.mrf.mxu0
    %1305 = vmatprep.mubr.f32.mxu0 0.0
    %1306 = vmatmul.mubr.f32.gmra.mxu0 %v242
    %v1307 = vpop.f32.mrf.mxu0
    %v1308 = vadd.f32 %v339, %v1307
    %v1309 = vpop.f32.mrf.mxu0
    %1310 = vmatprep.mubr.f32.mxu0 0.0
    %1311 = vmatmul.mubr.f32.gmra.mxu0 %v243
    %v1312 = vpop.f32.mrf.mxu0
    %v1313 = vadd.f32 %v339, %v1312
    %v1314 = vpop.f32.mrf.mxu0
    %1315 = vmatprep.mubr.f32.mxu0 0.0
    %1316 = vmatmul.mubr.f32.gmra.mxu0 %v244
    %v1317 = vpop.f32.mrf.mxu0
    %v1318 = vadd.f32 %v339, %v1317
    %v1319 = vpop.f32.mrf.mxu0
    %1320 = vmatprep.mubr.f32.mxu0 0.0
    %1321 = vmatmul.mubr.f32.gmra.mxu0 %v245
    %v1322 = vpop.f32.mrf.mxu0
    %v1323 = vadd.f32 %v339, %v1322
    %v1324 = vpop.f32.mrf.mxu0
    %1325 = vmatprep.mubr.f32.mxu0 0.0
    %1326 = vmatmul.mubr.f32.gmra.mxu0 %v246
    %v1327 = vpop.f32.mrf.mxu0
    %v1328 = vadd.f32 %v339, %v1327
    %v1329 = vpop.f32.mrf.mxu0
    %1330 = vmatprep.mubr.f32.mxu0 0.0
    %1331 = vmatmul.mubr.f32.gmra.mxu0 %v247
    %v1332 = vpop.f32.mrf.mxu0
    %v1333 = vadd.f32 %v339, %v1332
    %v1334 = vpop.f32.mrf.mxu0
    %1335 = vmatprep.mubr.f32.mxu0 0.0
    %1336 = vmatmul.mubr.f32.gmra.mxu0 %v248
    %v1337 = vpop.f32.mrf.mxu0
    %v1338 = vadd.f32 %v339, %v1337
    %v1339 = vpop.f32.mrf.mxu0
    %1340 = vmatprep.mubr.f32.mxu0 0.0
    %1341 = vmatmul.mubr.f32.gmra.mxu0 %v249
    %v1342 = vpop.f32.mrf.mxu0
    %v1343 = vadd.f32 %v339, %v1342
    %v1344 = vpop.f32.mrf.mxu0
    %1345 = vmatprep.mubr.f32.mxu0 0.0
    %1346 = vmatmul.mubr.f32.gmra.mxu0 %v250
    %v1347 = vpop.f32.mrf.mxu0
    %v1348 = vadd.f32 %v339, %v1347
    %v1349 = vpop.f32.mrf.mxu0
    %1350 = vmatprep.mubr.f32.mxu0 0.0
    %1351 = vmatmul.mubr.f32.gmra.mxu0 %v251
    %v1352 = vpop.f32.mrf.mxu0
    %v1353 = vadd.f32 %v339, %v1352
    %v1354 = vpop.f32.mrf.mxu0
    %1355 = vmatprep.mubr.f32.mxu0 0.0
    %1356 = vmatmul.mubr.f32.gmra.mxu0 %v252
    %v1357 = vpop.f32.mrf.mxu0
    %v1358 = vadd.f32 %v339, %v1357
    %v1359 = vpop.f32.mrf.mxu0
    %1360 = vmatprep.mubr.f32.mxu0 0.0
    %1361 = vmatmul.mubr.f32.gmra.mxu0 %v253
    %v1362 = vpop.f32.mrf.mxu0
    %v1363 = vadd.f32 %v339, %v1362
    %v1364 = vpop.f32.mrf.mxu0
    %1365 = vmatprep.mubr.f32.mxu0 0.0
    %1366 = vmatmul.mubr.f32.gmra.mxu0 %v254
    %v1367 = vpop.f32.mrf.mxu0
    %v1368 = vadd.f32 %v339, %v1367
    %v1369 = vpop.f32.mrf.mxu0
    %1370 = vmatprep.mubr.f32.mxu0 0.0
    %1371 = vmatmul.mubr.f32.gmra.mxu0 %v255
    %v1372 = vpop.f32.mrf.mxu0
    %v1373 = vadd.f32 %v339, %v1372
    %v1374 = vpop.f32.mrf.mxu0
    %1375 = vmatprep.mubr.f32.mxu0 0.0
    %1376 = vmatmul.mubr.f32.gmra.mxu0 %v256
    %v1377 = vpop.f32.mrf.mxu0
    %v1378 = vadd.f32 %v339, %v1377
    %v1379 = vpop.f32.mrf.mxu0
    %1380 = vmatprep.mubr.f32.mxu0 0.0
    %1381 = vmatmul.mubr.f32.gmra.mxu0 %v257
    %v1382 = vpop.f32.mrf.mxu0
    %v1383 = vadd.f32 %v339, %v1382
    %v1384 = vpop.f32.mrf.mxu0
    %1385 = vmatprep.mubr.f32.mxu0 0.0
    %1386 = vmatmul.mubr.f32.gmra.mxu0 %v258
    %v1387 = vpop.f32.mrf.mxu0
    %v1388 = vadd.f32 %v339, %v1387
    %v1389 = vpop.f32.mrf.mxu0
    %1390 = vmatprep.mubr.f32.mxu0 0.0
    %1391 = vmatmul.mubr.f32.gmra.mxu0 %v259
    %v1392 = vpop.f32.mrf.mxu0
    %v1393 = vadd.f32 %v339, %v1392
    %v1394 = vpop.f32.mrf.mxu0
    %1395 = vmatprep.mubr.f32.mxu0 0.0
    %1396 = vmatmul.mubr.f32.gmra.mxu0 %v260
    %v1397 = vpop.f32.mrf.mxu0
    %v1398 = vadd.f32 %v339, %v1397
    %v1399 = vpop.f32.mrf.mxu0
    %1400 = vmatprep.mubr.f32.mxu0 0.0
    %1401 = vmatmul.mubr.f32.gmra.mxu0 %v261
    %v1402 = vpop.f32.mrf.mxu0
    %v1403 = vadd.f32 %v339, %v1402
    %v1404 = vpop.f32.mrf.mxu0
    %1405 = vmatprep.mubr.f32.mxu0 0.0
    %1406 = vmatmul.mubr.f32.gmra.mxu0 %v262
    %v1407 = vpop.f32.mrf.mxu0
    %v1408 = vadd.f32 %v339, %v1407
    %v1409 = vpop.f32.mrf.mxu0
    %1410 = vmatprep.mubr.f32.mxu0 0.0
    %1411 = vmatmul.mubr.f32.gmra.mxu0 %v263
    %v1412 = vpop.f32.mrf.mxu0
    %v1413 = vadd.f32 %v339, %v1412
    %v1414 = vpop.f32.mrf.mxu0
    %1415 = vmatprep.mubr.f32.mxu0 0.0
    %1416 = vmatmul.mubr.f32.gmra.mxu0 %v264
    %v1417 = vpop.f32.mrf.mxu0
    %v1418 = vadd.f32 %v339, %v1417
    %v1419 = vpop.f32.mrf.mxu0
    %1420 = vmatprep.mubr.f32.mxu0 0.0
    %1421 = vmatmul.mubr.f32.gmra.mxu0 %v265
    %v1422 = vpop.f32.mrf.mxu0
    %v1423 = vadd.f32 %v339, %v1422
    %v1424 = vpop.f32.mrf.mxu0
    %1425 = vmatprep.mubr.f32.mxu0 0.0
    %1426 = vmatmul.mubr.f32.gmra.mxu0 %v266
    %v1427 = vpop.f32.mrf.mxu0
    %v1428 = vadd.f32 %v339, %v1427
    %v1429 = vpop.f32.mrf.mxu0
    %1430 = vmatprep.mubr.f32.mxu0 0.0
    %1431 = vmatmul.mubr.f32.gmra.mxu0 %v267
    %v1432 = vpop.f32.mrf.mxu0
    %v1433 = vadd.f32 %v339, %v1432
    %v1434 = vpop.f32.mrf.mxu0
    %1435 = vmatprep.mubr.f32.mxu0 0.0
    %1436 = vmatmul.mubr.f32.gmra.mxu0 %v268
    %v1437 = vpop.f32.mrf.mxu0
    %v1438 = vadd.f32 %v339, %v1437
    %v1439 = vpop.f32.mrf.mxu0
    %1440 = vmatprep.mubr.f32.mxu0 0.0
    %1441 = vmatmul.mubr.f32.gmra.mxu0 %v269
    %v1442 = vpop.f32.mrf.mxu0
    %v1443 = vadd.f32 %v339, %v1442
    %v1444 = vpop.f32.mrf.mxu0
    %1445 = vmatprep.mubr.f32.mxu0 0.0
    %1446 = vmatmul.mubr.f32.gmra.mxu0 %v270
    %v1447 = vpop.f32.mrf.mxu0
    %v1448 = vadd.f32 %v339, %v1447
    %v1449 = vpop.f32.mrf.mxu0
    %1450 = vmatprep.mubr.f32.mxu0 0.0
    %1451 = vmatmul.mubr.f32.gmra.mxu0 %v271
    %v1452 = vpop.f32.mrf.mxu0
    %v1453 = vadd.f32 %v339, %v1452
    %v1454 = vpop.f32.mrf.mxu0
    %1455 = vmatprep.mubr.f32.mxu0 0.0
    %1456 = vmatmul.mubr.f32.gmra.mxu0 %v272
    %v1457 = vpop.f32.mrf.mxu0
    %v1458 = vadd.f32 %v339, %v1457
    %v1459 = vpop.f32.mrf.mxu0
    %1460 = vmatprep.mubr.f32.mxu0 0.0
    %1461 = vmatmul.mubr.f32.gmra.mxu0 %v273
    %v1462 = vpop.f32.mrf.mxu0
    %v1463 = vadd.f32 %v339, %v1462
    %v1464 = vpop.f32.mrf.mxu0
    %1465 = vmatprep.mubr.f32.mxu0 0.0
    %1466 = vmatmul.mubr.f32.gmra.mxu0 %v274
    %v1467 = vpop.f32.mrf.mxu0
    %v1468 = vadd.f32 %v339, %v1467
    %v1469 = vpop.f32.mrf.mxu0
    %1470 = vmatprep.mubr.f32.mxu0 0.0
    %1471 = vmatmul.mubr.f32.gmra.mxu0 %v275
    %v1472 = vpop.f32.mrf.mxu0
    %v1473 = vadd.f32 %v339, %v1472
    %v1474 = vpop.f32.mrf.mxu0
    %1475 = vmatprep.mubr.f32.mxu0 0.0
    %1476 = vmatmul.mubr.f32.gmra.mxu0 %v276
    %v1477 = vpop.f32.mrf.mxu0
    %v1478 = vadd.f32 %v339, %v1477
    %v1479 = vpop.f32.mrf.mxu0
    %1480 = vmatprep.mubr.f32.mxu0 0.0
    %1481 = vmatmul.mubr.f32.gmra.mxu0 %v277
    %v1482 = vpop.f32.mrf.mxu0
    %v1483 = vadd.f32 %v339, %v1482
    %v1484 = vpop.f32.mrf.mxu0
    %1485 = vmatprep.mubr.f32.mxu0 0.0
    %1486 = vmatmul.mubr.f32.gmra.mxu0 %v278
    %v1487 = vpop.f32.mrf.mxu0
    %v1488 = vadd.f32 %v339, %v1487
    %v1489 = vpop.f32.mrf.mxu0
    %1490 = vmatprep.mubr.f32.mxu0 0.0
    %1491 = vmatmul.mubr.f32.gmra.mxu0 %v279
    %v1492 = vpop.f32.mrf.mxu0
    %v1493 = vadd.f32 %v339, %v1492
    %v1494 = vpop.f32.mrf.mxu0
    %1495 = vmatprep.mubr.f32.mxu0 0.0
    %1496 = vmatmul.mubr.f32.gmra.mxu0 %v280
    %v1497 = vpop.f32.mrf.mxu0
    %v1498 = vadd.f32 %v339, %v1497
    %v1499 = vpop.f32.mrf.mxu0
    %1500 = vmatprep.mubr.f32.mxu0 0.0
    %1501 = vmatmul.mubr.f32.gmra.mxu0 %v281
    %v1502 = vpop.f32.mrf.mxu0
    %v1503 = vadd.f32 %v339, %v1502
    %v1504 = vpop.f32.mrf.mxu0
    %1505 = vmatprep.mubr.f32.mxu0 0.0
    %1506 = vmatmul.mubr.f32.gmra.mxu0 %v282
    %v1507 = vpop.f32.mrf.mxu0
    %v1508 = vadd.f32 %v339, %v1507
    %v1509 = vpop.f32.mrf.mxu0
    %1510 = vmatprep.mubr.f32.mxu0 0.0
    %1511 = vmatmul.mubr.f32.gmra.mxu0 %v283
    %v1512 = vpop.f32.mrf.mxu0
    %v1513 = vadd.f32 %v339, %v1512
    %v1514 = vpop.f32.mrf.mxu0
    %1515 = vmatprep.mubr.f32.mxu0 0.0
    %1516 = vmatmul.mubr.f32.gmra.mxu0 %v284
    %v1517 = vpop.f32.mrf.mxu0
    %v1518 = vadd.f32 %v339, %v1517
    %v1519 = vpop.f32.mrf.mxu0
    %1520 = vmatprep.mubr.f32.mxu0 0.0
    %1521 = vmatmul.mubr.f32.gmra.mxu0 %v285
    %v1522 = vpop.f32.mrf.mxu0
    %v1523 = vadd.f32 %v339, %v1522
    %v1524 = vpop.f32.mrf.mxu0
    %1525 = vmatprep.mubr.f32.mxu0 0.0
    %1526 = vmatmul.mubr.f32.gmra.mxu0 %v286
    %v1527 = vpop.f32.mrf.mxu0
    %v1528 = vadd.f32 %v339, %v1527
    %v1529 = vpop.f32.mrf.mxu0
    %1530 = vmatprep.mubr.f32.mxu0 0.0
    %1531 = vmatmul.mubr.f32.gmra.mxu0 %v287
    %v1532 = vpop.f32.mrf.mxu0
    %v1533 = vadd.f32 %v339, %v1532
    %v1534 = vpop.f32.mrf.mxu0
    %1535 = vmatprep.mubr.f32.mxu0 0.0
    %1536 = vmatmul.mubr.f32.gmra.mxu0 %v288
    %v1537 = vpop.f32.mrf.mxu0
    %v1538 = vadd.f32 %v339, %v1537
    %v1539 = vpop.f32.mrf.mxu0
    %1540 = vmatprep.mubr.f32.mxu0 0.0
    %1541 = vmatmul.mubr.f32.gmra.mxu0 %v289
    %v1542 = vpop.f32.mrf.mxu0
    %v1543 = vadd.f32 %v339, %v1542
    %v1544 = vpop.f32.mrf.mxu0
    %1545 = vmatprep.mubr.f32.mxu0 0.0
    %1546 = vmatmul.mubr.f32.gmra.mxu0 %v290
    %v1547 = vpop.f32.mrf.mxu0
    %v1548 = vadd.f32 %v339, %v1547
    %v1549 = vpop.f32.mrf.mxu0
    %1550 = vmatprep.mubr.f32.mxu0 0.0
    %1551 = vmatmul.mubr.f32.gmra.mxu0 %v291
    %v1552 = vpop.f32.mrf.mxu0
    %v1553 = vadd.f32 %v339, %v1552
    %v1554 = vpop.f32.mrf.mxu0
    %1555 = vmatprep.mubr.f32.mxu0 0.0
    %1556 = vmatmul.mubr.f32.gmra.mxu0 %v292
    %v1557 = vpop.f32.mrf.mxu0
    %v1558 = vadd.f32 %v339, %v1557
    %v1559 = vpop.f32.mrf.mxu0
    %1560 = vmatprep.mubr.f32.mxu0 0.0
    %1561 = vmatmul.mubr.f32.gmra.mxu0 %v293
    %v1562 = vpop.f32.mrf.mxu0
    %v1563 = vadd.f32 %v339, %v1562
    %v1564 = vpop.f32.mrf.mxu0
    %1565 = vmatprep.mubr.f32.mxu0 0.0
    %1566 = vmatmul.mubr.f32.gmra.mxu0 %v294
    %v1567 = vpop.f32.mrf.mxu0
    %v1568 = vadd.f32 %v339, %v1567
    %v1569 = vpop.f32.mrf.mxu0
    %1570 = vmatprep.mubr.f32.mxu0 0.0
    %1571 = vmatmul.mubr.f32.gmra.mxu0 %v295
    %v1572 = vpop.f32.mrf.mxu0
    %v1573 = vadd.f32 %v339, %v1572
    %v1574 = vpop.f32.mrf.mxu0
    %1575 = vmatprep.mubr.f32.mxu0 0.0
    %1576 = vmatmul.mubr.f32.gmra.mxu0 %v296
    %v1577 = vpop.f32.mrf.mxu0
    %v1578 = vadd.f32 %v339, %v1577
    %v1579 = vpop.f32.mrf.mxu0
    %1580 = vmatprep.mubr.f32.mxu0 0.0
    %1581 = vmatmul.mubr.f32.gmra.mxu0 %v297
    %v1582 = vpop.f32.mrf.mxu0
    %v1583 = vadd.f32 %v339, %v1582
    %v1584 = vpop.f32.mrf.mxu0
    %1585 = vmatprep.mubr.f32.mxu0 0.0
    %1586 = vmatmul.mubr.f32.gmra.mxu0 %v298
    %v1587 = vpop.f32.mrf.mxu0
    %v1588 = vadd.f32 %v339, %v1587
    %v1589 = vpop.f32.mrf.mxu0
    %1590 = vmatprep.mubr.f32.mxu0 0.0
    %1591 = vmatmul.mubr.f32.gmra.mxu0 %v299
    %v1592 = vpop.f32.mrf.mxu0
    %v1593 = vadd.f32 %v339, %v1592
    %v1594 = vpop.f32.mrf.mxu0
    %1595 = vmatprep.mubr.f32.mxu0 0.0
    %1596 = vmatmul.mubr.f32.gmra.mxu0 %v300
    %v1597 = vpop.f32.mrf.mxu0
    %v1598 = vadd.f32 %v339, %v1597
    %v1599 = vpop.f32.mrf.mxu0
    %1600 = vmatprep.mubr.f32.mxu0 0.0
    %1601 = vmatmul.mubr.f32.gmra.mxu0 %v301
    %v1602 = vpop.f32.mrf.mxu0
    %v1603 = vadd.f32 %v339, %v1602
    %v1604 = vpop.f32.mrf.mxu0
    %1605 = vmatprep.mubr.f32.mxu0 0.0
    %1606 = vmatmul.mubr.f32.gmra.mxu0 %v302
    %v1607 = vpop.f32.mrf.mxu0
    %v1608 = vadd.f32 %v339, %v1607
    %v1609 = vpop.f32.mrf.mxu0
    %1610 = vmatprep.mubr.f32.mxu0 0.0
    %1611 = vmatmul.mubr.f32.gmra.mxu0 %v303
    %v1612 = vpop.f32.mrf.mxu0
    %v1613 = vadd.f32 %v339, %v1612
    %v1614 = vpop.f32.mrf.mxu0
    %1615 = vmatprep.mubr.f32.mxu0 0.0
    %1616 = vmatmul.mubr.f32.gmra.mxu0 %v304
    %v1617 = vpop.f32.mrf.mxu0
    %v1618 = vadd.f32 %v339, %v1617
    %v1619 = vpop.f32.mrf.mxu0
    %1620 = vmatprep.mubr.f32.mxu0 0.0
    %1621 = vmatmul.mubr.f32.gmra.mxu0 %v305
    %v1622 = vpop.f32.mrf.mxu0
    %v1623 = vadd.f32 %v339, %v1622
    %v1624 = vpop.f32.mrf.mxu0
    %1625 = vmatprep.mubr.f32.mxu0 0.0
    %1626 = vmatmul.mubr.f32.gmra.mxu0 %v306
    %v1627 = vpop.f32.mrf.mxu0
    %v1628 = vadd.f32 %v339, %v1627
    %v1629 = vpop.f32.mrf.mxu0
    %1630 = vmatprep.mubr.f32.mxu0 0.0
    %1631 = vmatmul.mubr.f32.gmra.mxu0 %v307
    %v1632 = vpop.f32.mrf.mxu0
    %v1633 = vadd.f32 %v339, %v1632
    %v1634 = vpop.f32.mrf.mxu0
    %1635 = vmatprep.mubr.f32.mxu0 0.0
    %1636 = vmatmul.mubr.f32.gmra.mxu0 %v308
    %v1637 = vpop.f32.mrf.mxu0
    %v1638 = vadd.f32 %v339, %v1637
    %v1639 = vpop.f32.mrf.mxu0
    %1640 = vmatprep.mubr.f32.mxu0 0.0
    %1641 = vmatmul.mubr.f32.gmra.mxu0 %v309
    %v1642 = vpop.f32.mrf.mxu0
    %v1643 = vadd.f32 %v339, %v1642
    %v1644 = vpop.f32.mrf.mxu0
    %1645 = vmatprep.mubr.f32.mxu0 0.0
    %1646 = vmatmul.mubr.f32.gmra.mxu0 %v310
    %v1647 = vpop.f32.mrf.mxu0
    %v1648 = vadd.f32 %v339, %v1647
    %v1649 = vpop.f32.mrf.mxu0
    %1650 = vmatprep.mubr.f32.mxu0 0.0
    %1651 = vmatmul.mubr.f32.gmra.mxu0 %v311
    %v1652 = vpop.f32.mrf.mxu0
    %v1653 = vadd.f32 %v339, %v1652
    %v1654 = vpop.f32.mrf.mxu0
    %1655 = vmatprep.mubr.f32.mxu0 0.0
    %1656 = vmatmul.mubr.f32.gmra.mxu0 %v312
    %v1657 = vpop.f32.mrf.mxu0
    %v1658 = vadd.f32 %v339, %v1657
    %v1659 = vpop.f32.mrf.mxu0
    %1660 = vmatprep.mubr.f32.mxu0 0.0
    %1661 = vmatmul.mubr.f32.gmra.mxu0 %v313
    %v1662 = vpop.f32.mrf.mxu0
    %v1663 = vadd.f32 %v339, %v1662
    %v1664 = vpop.f32.mrf.mxu0
    %1665 = vmatprep.mubr.f32.mxu0 0.0
    %1666 = vmatmul.mubr.f32.gmra.mxu0 %v314
    %v1667 = vpop.f32.mrf.mxu0
    %v1668 = vadd.f32 %v339, %v1667
    %v1669 = vpop.f32.mrf.mxu0
    %1670 = vmatprep.mubr.f32.mxu0 0.0
    %1671 = vmatmul.mubr.f32.gmra.mxu0 %v315
    %v1672 = vpop.f32.mrf.mxu0
    %v1673 = vadd.f32 %v339, %v1672
    %v1674 = vpop.f32.mrf.mxu0
    %1675 = vmatprep.mubr.f32.mxu0 0.0
    %1676 = vmatmul.mubr.f32.gmra.mxu0 %v316
    %v1677 = vpop.f32.mrf.mxu0
    %v1678 = vadd.f32 %v339, %v1677
    %v1679 = vpop.f32.mrf.mxu0
    %1680 = vmatprep.mubr.f32.mxu0 0.0
    %1681 = vmatmul.mubr.f32.gmra.mxu0 %v317
    %v1682 = vpop.f32.mrf.mxu0
    %v1683 = vadd.f32 %v339, %v1682
    %v1684 = vpop.f32.mrf.mxu0
    %1685 = vdwg.mxu0
    %v1686 = vmax.f32 %v408, 0.0
    %v1687 = vmax.f32 %v413, 0.0
    %v1688 = vmax.f32 %v418, 0.0
    %v1689 = vmax.f32 %v423, 0.0
    %v1690 = vmax.f32 %v428, 0.0
    %v1691 = vmax.f32 %v433, 0.0
    %v1692 = vmax.f32 %v438, 0.0
    %v1693 = vmax.f32 %v443, 0.0
    %v1694 = vmax.f32 %v448, 0.0
    %v1695 = vmax.f32 %v453, 0.0
    %v1696 = vmax.f32 %v458, 0.0
    %v1697 = vmax.f32 %v463, 0.0
    %v1698 = vmax.f32 %v468, 0.0
    %v1699 = vmax.f32 %v473, 0.0
    %v1700 = vmax.f32 %v478, 0.0
    %v1701 = vmax.f32 %v483, 0.0
    %v1702 = vmax.f32 %v488, 0.0
    %v1703 = vmax.f32 %v493, 0.0
    %v1704 = vmax.f32 %v498, 0.0
    %v1705 = vmax.f32 %v503, 0.0
    %v1706 = vmax.f32 %v508, 0.0
    %v1707 = vmax.f32 %v513, 0.0
    %v1708 = vmax.f32 %v518, 0.0
    %v1709 = vmax.f32 %v523, 0.0
    %v1710 = vmax.f32 %v528, 0.0
    %v1711 = vmax.f32 %v533, 0.0
    %v1712 = vmax.f32 %v538, 0.0
    %v1713 = vmax.f32 %v543, 0.0
    %v1714 = vmax.f32 %v548, 0.0
    %v1715 = vmax.f32 %v553, 0.0
    %v1716 = vmax.f32 %v558, 0.0
    %v1717 = vmax.f32 %v563, 0.0
    %v1718 = vmax.f32 %v568, 0.0
    %v1719 = vmax.f32 %v573, 0.0
    %v1720 = vmax.f32 %v578, 0.0
    %v1721 = vmax.f32 %v583, 0.0
    %v1722 = vmax.f32 %v588, 0.0
    %v1723 = vmax.f32 %v593, 0.0
    %v1724 = vmax.f32 %v598, 0.0
    %v1725 = vmax.f32 %v603, 0.0
    %v1726 = vmax.f32 %v608, 0.0
    %v1727 = vmax.f32 %v613, 0.0
    %v1728 = vmax.f32 %v618, 0.0
    %v1729 = vmax.f32 %v623, 0.0
    %v1730 = vmax.f32 %v628, 0.0
    %v1731 = vmax.f32 %v633, 0.0
    %v1732 = vmax.f32 %v638, 0.0
    %v1733 = vmax.f32 %v643, 0.0
    %v1734 = vmax.f32 %v648, 0.0
    %v1735 = vmax.f32 %v653, 0.0
    %v1736 = vmax.f32 %v658, 0.0
    %v1737 = vmax.f32 %v663, 0.0
    %v1738 = vmax.f32 %v668, 0.0
    %v1739 = vmax.f32 %v673, 0.0
    %v1740 = vmax.f32 %v678, 0.0
    %v1741 = vmax.f32 %v683, 0.0
    %v1742 = vmax.f32 %v688, 0.0
    %v1743 = vmax.f32 %v693, 0.0
    %v1744 = vmax.f32 %v698, 0.0
    %v1745 = vmax.f32 %v703, 0.0
    %v1746 = vmax.f32 %v708, 0.0
    %v1747 = vmax.f32 %v713, 0.0
    %v1748 = vmax.f32 %v718, 0.0
    %v1749 = vmax.f32 %v723, 0.0
    %v1750 = vmax.f32 %v728, 0.0
    %v1751 = vmax.f32 %v733, 0.0
    %v1752 = vmax.f32 %v738, 0.0
    %v1753 = vmax.f32 %v743, 0.0
    %v1754 = vmax.f32 %v748, 0.0
    %v1755 = vmax.f32 %v753, 0.0
    %v1756 = vmax.f32 %v758, 0.0
    %v1757 = vmax.f32 %v763, 0.0
    %v1758 = vmax.f32 %v768, 0.0
    %v1759 = vmax.f32 %v773, 0.0
    %v1760 = vmax.f32 %v778, 0.0
    %v1761 = vmax.f32 %v783, 0.0
    %v1762 = vmax.f32 %v788, 0.0
    %v1763 = vmax.f32 %v793, 0.0
    %v1764 = vmax.f32 %v798, 0.0
    %v1765 = vmax.f32 %v803, 0.0
    %v1766 = vmax.f32 %v808, 0.0
    %v1767 = vmax.f32 %v813, 0.0
    %v1768 = vmax.f32 %v818, 0.0
    %v1769 = vmax.f32 %v823, 0.0
    %v1770 = vmax.f32 %v828, 0.0
    %v1771 = vmax.f32 %v833, 0.0
    %v1772 = vmax.f32 %v838, 0.0
    %v1773 = vmax.f32 %v843, 0.0
    %v1774 = vmax.f32 %v848, 0.0
    %v1775 = vmax.f32 %v853, 0.0
    %v1776 = vmax.f32 %v858, 0.0
    %v1777 = vmax.f32 %v863, 0.0
    %v1778 = vmax.f32 %v868, 0.0
    %v1779 = vmax.f32 %v873, 0.0
    %v1780 = vmax.f32 %v878, 0.0
    %v1781 = vmax.f32 %v883, 0.0
    %v1782 = vmax.f32 %v888, 0.0
    %v1783 = vmax.f32 %v893, 0.0
    %v1784 = vmax.f32 %v898, 0.0
    %v1785 = vmax.f32 %v903, 0.0
    %v1786 = vmax.f32 %v908, 0.0
    %v1787 = vmax.f32 %v913, 0.0
    %v1788 = vmax.f32 %v918, 0.0
    %v1789 = vmax.f32 %v923, 0.0
    %v1790 = vmax.f32 %v928, 0.0
    %v1791 = vmax.f32 %v933, 0.0
    %v1792 = vmax.f32 %v938, 0.0
    %v1793 = vmax.f32 %v943, 0.0
    %v1794 = vmax.f32 %v948, 0.0
    %v1795 = vmax.f32 %v953, 0.0
    %v1796 = vmax.f32 %v958, 0.0
    %v1797 = vmax.f32 %v963, 0.0
    %v1798 = vmax.f32 %v968, 0.0
    %v1799 = vmax.f32 %v973, 0.0
    %v1800 = vmax.f32 %v978, 0.0
    %v1801 = vmax.f32 %v983, 0.0
    %v1802 = vmax.f32 %v988, 0.0
    %v1803 = vmax.f32 %v993, 0.0
    %v1804 = vmax.f32 %v998, 0.0
    %v1805 = vmax.f32 %v1003, 0.0
    %v1806 = vmax.f32 %v1008, 0.0
    %v1807 = vmax.f32 %v1013, 0.0
    %v1808 = vmax.f32 %v1018, 0.0
    %v1809 = vmax.f32 %v1023, 0.0
    %v1810 = vmax.f32 %v1028, 0.0
    %v1811 = vmax.f32 %v1033, 0.0
    %v1812 = vmax.f32 %v1038, 0.0
    %v1813 = vmax.f32 %v1043, 0.0
    %v1814 = vmax.f32 %v1048, 0.0
    %v1815 = vmax.f32 %v1053, 0.0
    %v1816 = vmax.f32 %v1058, 0.0
    %v1817 = vmax.f32 %v1063, 0.0
    %v1818 = vmax.f32 %v1068, 0.0
    %v1819 = vmax.f32 %v1073, 0.0
    %v1820 = vmax.f32 %v1078, 0.0
    %v1821 = vmax.f32 %v1083, 0.0
    %v1822 = vmax.f32 %v1088, 0.0
    %v1823 = vmax.f32 %v1093, 0.0
    %v1824 = vmax.f32 %v1098, 0.0
    %v1825 = vmax.f32 %v1103, 0.0
    %v1826 = vmax.f32 %v1108, 0.0
    %v1827 = vmax.f32 %v1113, 0.0
    %v1828 = vmax.f32 %v1118, 0.0
    %v1829 = vmax.f32 %v1123, 0.0
    %v1830 = vmax.f32 %v1128, 0.0
    %v1831 = vmax.f32 %v1133, 0.0
    %v1832 = vmax.f32 %v1138, 0.0
    %v1833 = vmax.f32 %v1143, 0.0
    %v1834 = vmax.f32 %v1148, 0.0
    %v1835 = vmax.f32 %v1153, 0.0
    %v1836 = vmax.f32 %v1158, 0.0
    %v1837 = vmax.f32 %v1163, 0.0
    %v1838 = vmax.f32 %v1168, 0.0
    %v1839 = vmax.f32 %v1173, 0.0
    %v1840 = vmax.f32 %v1178, 0.0
    %v1841 = vmax.f32 %v1183, 0.0
    %v1842 = vmax.f32 %v1188, 0.0
    %v1843 = vmax.f32 %v1193, 0.0
    %v1844 = vmax.f32 %v1198, 0.0
    %v1845 = vmax.f32 %v1203, 0.0
    %v1846 = vmax.f32 %v1208, 0.0
    %v1847 = vmax.f32 %v1213, 0.0
    %v1848 = vmax.f32 %v1218, 0.0
    %v1849 = vmax.f32 %v1223, 0.0
    %v1850 = vmax.f32 %v1228, 0.0
    %v1851 = vmax.f32 %v1233, 0.0
    %v1852 = vmax.f32 %v1238, 0.0
    %v1853 = vmax.f32 %v1243, 0.0
    %v1854 = vmax.f32 %v1248, 0.0
    %v1855 = vmax.f32 %v1253, 0.0
    %v1856 = vmax.f32 %v1258, 0.0
    %v1857 = vmax.f32 %v1263, 0.0
    %v1858 = vmax.f32 %v1268, 0.0
    %v1859 = vmax.f32 %v1273, 0.0
    %v1860 = vmax.f32 %v1278, 0.0
    %v1861 = vmax.f32 %v1283, 0.0
    %v1862 = vmax.f32 %v1288, 0.0
    %v1863 = vmax.f32 %v1293, 0.0
    %v1864 = vmax.f32 %v1298, 0.0
    %v1865 = vmax.f32 %v1303, 0.0
    %v1866 = vmax.f32 %v1308, 0.0
    %v1867 = vmax.f32 %v1313, 0.0
    %v1868 = vmax.f32 %v1318, 0.0
    %v1869 = vmax.f32 %v1323, 0.0
    %v1870 = vmax.f32 %v1328, 0.0
    %v1871 = vmax.f32 %v1333, 0.0
    %v1872 = vmax.f32 %v1338, 0.0
    %v1873 = vmax.f32 %v1343, 0.0
    %v1874 = vmax.f32 %v1348, 0.0
    %v1875 = vmax.f32 %v1353, 0.0
    %v1876 = vmax.f32 %v1358, 0.0
    %v1877 = vmax.f32 %v1363, 0.0
    %v1878 = vmax.f32 %v1368, 0.0
    %v1879 = vmax.f32 %v1373, 0.0
    %v1880 = vmax.f32 %v1378, 0.0
    %v1881 = vmax.f32 %v1383, 0.0
    %v1882 = vmax.f32 %v1388, 0.0
    %v1883 = vmax.f32 %v1393, 0.0
    %v1884 = vmax.f32 %v1398, 0.0
    %v1885 = vmax.f32 %v1403, 0.0
    %v1886 = vmax.f32 %v1408, 0.0
    %v1887 = vmax.f32 %v1413, 0.0
    %v1888 = vmax.f32 %v1418, 0.0
    %v1889 = vmax.f32 %v1423, 0.0
    %v1890 = vmax.f32 %v1428, 0.0
    %v1891 = vmax.f32 %v1433, 0.0
    %v1892 = vmax.f32 %v1438, 0.0
    %v1893 = vmax.f32 %v1443, 0.0
    %v1894 = vmax.f32 %v1448, 0.0
    %v1895 = vmax.f32 %v1453, 0.0
    %v1896 = vmax.f32 %v1458, 0.0
    %v1897 = vmax.f32 %v1463, 0.0
    %v1898 = vmax.f32 %v1468, 0.0
    %v1899 = vmax.f32 %v1473, 0.0
    %v1900 = vmax.f32 %v1478, 0.0
    %v1901 = vmax.f32 %v1483, 0.0
    %v1902 = vmax.f32 %v1488, 0.0
    %v1903 = vmax.f32 %v1493, 0.0
    %v1904 = vmax.f32 %v1498, 0.0
    %v1905 = vmax.f32 %v1503, 0.0
    %v1906 = vmax.f32 %v1508, 0.0
    %v1907 = vmax.f32 %v1513, 0.0
    %v1908 = vmax.f32 %v1518, 0.0
    %v1909 = vmax.f32 %v1523, 0.0
    %v1910 = vmax.f32 %v1528, 0.0
    %v1911 = vmax.f32 %v1533, 0.0
    %v1912 = vmax.f32 %v1538, 0.0
    %v1913 = vmax.f32 %v1543, 0.0
    %v1914 = vmax.f32 %v1548, 0.0
    %v1915 = vmax.f32 %v1553, 0.0
    %v1916 = vmax.f32 %v1558, 0.0
    %v1917 = vmax.f32 %v1563, 0.0
    %v1918 = vmax.f32 %v1568, 0.0
    %v1919 = vmax.f32 %v1573, 0.0
    %v1920 = vmax.f32 %v1578, 0.0
    %v1921 = vmax.f32 %v1583, 0.0
    %v1922 = vmax.f32 %v1588, 0.0
    %v1923 = vmax.f32 %v1593, 0.0
    %v1924 = vmax.f32 %v1598, 0.0
    %v1925 = vmax.f32 %v1603, 0.0
    %v1926 = vmax.f32 %v1608, 0.0
    %v1927 = vmax.f32 %v1613, 0.0
    %v1928 = vmax.f32 %v1618, 0.0
    %v1929 = vmax.f32 %v1623, 0.0
    %v1930 = vmax.f32 %v1628, 0.0
    %v1931 = vmax.f32 %v1633, 0.0
    %v1932 = vmax.f32 %v1638, 0.0
    %v1933 = vmax.f32 %v1643, 0.0
    %v1934 = vmax.f32 %v1648, 0.0
    %v1935 = vmax.f32 %v1653, 0.0
    %v1936 = vmax.f32 %v1658, 0.0
    %v1937 = vmax.f32 %v1663, 0.0
    %v1938 = vmax.f32 %v1668, 0.0
    %v1939 = vmax.f32 %v1673, 0.0
    %v1940 = vmax.f32 %v1678, 0.0
    %v1941 = vmax.f32 %v1683, 0.0
    %v1942 = vadd.f32 %v1686, %v1687
    %v1943 = vadd.f32 %v1942, %v1688
    %v1944 = vadd.f32 %v1943, %v1689
    %v1945 = vadd.f32 %v1944, %v1690
    %v1946 = vadd.f32 %v1945, %v1691
    %v1947 = vadd.f32 %v1946, %v1692
    %v1948 = vadd.f32 %v1947, %v1693
    %v1949 = vadd.f32 %v1948, %v1694
    %v1950 = vadd.f32 %v1949, %v1695
    %v1951 = vadd.f32 %v1950, %v1696
    %v1952 = vadd.f32 %v1951, %v1697
    %v1953 = vadd.f32 %v1952, %v1698
    %v1954 = vadd.f32 %v1953, %v1699
    %v1955 = vadd.f32 %v1954, %v1700
    %v1956 = vadd.f32 %v1955, %v1701
    %v1957 = vadd.f32 %v1956, %v1702
    %v1958 = vadd.f32 %v1957, %v1703
    %v1959 = vadd.f32 %v1958, %v1704
    %v1960 = vadd.f32 %v1959, %v1705
    %v1961 = vadd.f32 %v1960, %v1706
    %v1962 = vadd.f32 %v1961, %v1707
    %v1963 = vadd.f32 %v1962, %v1708
    %v1964 = vadd.f32 %v1963, %v1709
    %v1965 = vadd.f32 %v1964, %v1710
    %v1966 = vadd.f32 %v1965, %v1711
    %v1967 = vadd.f32 %v1966, %v1712
    %v1968 = vadd.f32 %v1967, %v1713
    %v1969 = vadd.f32 %v1968, %v1714
    %v1970 = vadd.f32 %v1969, %v1715
    %v1971 = vadd.f32 %v1970, %v1716
    %v1972 = vadd.f32 %v1971, %v1717
    %v1973 = vrot.slane %v1972, 4
    %v1974 = vadd.f32 %v1972, %v1973
    %v1975 = vrot.slane %v1974, 2
    %v1976 = vadd.f32 %v1974, %v1975
    %v1977 = vrot.slane %v1976, 1
    %v1978 = vadd.f32 %v1976, %v1977
    %v1979 = vadd.f32 %v1718, %v1719
    %v1980 = vadd.f32 %v1979, %v1720
    %v1981 = vadd.f32 %v1980, %v1721
    %v1982 = vadd.f32 %v1981, %v1722
    %v1983 = vadd.f32 %v1982, %v1723
    %v1984 = vadd.f32 %v1983, %v1724
    %v1985 = vadd.f32 %v1984, %v1725
    %v1986 = vadd.f32 %v1985, %v1726
    %v1987 = vadd.f32 %v1986, %v1727
    %v1988 = vadd.f32 %v1987, %v1728
    %v1989 = vadd.f32 %v1988, %v1729
    %v1990 = vadd.f32 %v1989, %v1730
    %v1991 = vadd.f32 %v1990, %v1731
    %v1992 = vadd.f32 %v1991, %v1732
    %v1993 = vadd.f32 %v1992, %v1733
    %v1994 = vadd.f32 %v1993, %v1734
    %v1995 = vadd.f32 %v1994, %v1735
    %v1996 = vadd.f32 %v1995, %v1736
    %v1997 = vadd.f32 %v1996, %v1737
    %v1998 = vadd.f32 %v1997, %v1738
    %v1999 = vadd.f32 %v1998, %v1739
    %v2000 = vadd.f32 %v1999, %v1740
    %v2001 = vadd.f32 %v2000, %v1741
    %v2002 = vadd.f32 %v2001, %v1742
    %v2003 = vadd.f32 %v2002, %v1743
    %v2004 = vadd.f32 %v2003, %v1744
    %v2005 = vadd.f32 %v2004, %v1745
    %v2006 = vadd.f32 %v2005, %v1746
    %v2007 = vadd.f32 %v2006, %v1747
    %v2008 = vadd.f32 %v2007, %v1748
    %v2009 = vadd.f32 %v2008, %v1749
    %v2010 = vrot.slane %v2009, 4
    %v2011 = vadd.f32 %v2009, %v2010
    %v2012 = vrot.slane %v2011, 2
    %v2013 = vadd.f32 %v2011, %v2012
    %v2014 = vrot.slane %v2013, 1
    %v2015 = vadd.f32 %v2013, %v2014
    %v2016 = vadd.f32 %v1750, %v1751
    %v2017 = vadd.f32 %v2016, %v1752
    %v2018 = vadd.f32 %v2017, %v1753
    %v2019 = vadd.f32 %v2018, %v1754
    %v2020 = vadd.f32 %v2019, %v1755
    %v2021 = vadd.f32 %v2020, %v1756
    %v2022 = vadd.f32 %v2021, %v1757
    %v2023 = vadd.f32 %v2022, %v1758
    %v2024 = vadd.f32 %v2023, %v1759
    %v2025 = vadd.f32 %v2024, %v1760
    %v2026 = vadd.f32 %v2025, %v1761
    %v2027 = vadd.f32 %v2026, %v1762
    %v2028 = vadd.f32 %v2027, %v1763
    %v2029 = vadd.f32 %v2028, %v1764
    %v2030 = vadd.f32 %v2029, %v1765
    %v2031 = vadd.f32 %v2030, %v1766
    %v2032 = vadd.f32 %v2031, %v1767
    %v2033 = vadd.f32 %v2032, %v1768
    %v2034 = vadd.f32 %v2033, %v1769
    %v2035 = vadd.f32 %v2034, %v1770
    %v2036 = vadd.f32 %v2035, %v1771
    %v2037 = vadd.f32 %v2036, %v1772
    %v2038 = vadd.f32 %v2037, %v1773
    %v2039 = vadd.f32 %v2038, %v1774
    %v2040 = vadd.f32 %v2039, %v1775
    %v2041 = vadd.f32 %v2040, %v1776
    %v2042 = vadd.f32 %v2041, %v1777
    %v2043 = vadd.f32 %v2042, %v1778
    %v2044 = vadd.f32 %v2043, %v1779
    %v2045 = vadd.f32 %v2044, %v1780
    %v2046 = vadd.f32 %v2045, %v1781
    %v2047 = vrot.slane %v2046, 4
    %v2048 = vadd.f32 %v2046, %v2047
    %v2049 = vrot.slane %v2048, 2
    %v2050 = vadd.f32 %v2048, %v2049
    %v2051 = vrot.slane %v2050, 1
    %v2052 = vadd.f32 %v2050, %v2051
    %v2053 = vadd.f32 %v1782, %v1783
    %v2054 = vadd.f32 %v2053, %v1784
    %v2055 = vadd.f32 %v2054, %v1785
    %v2056 = vadd.f32 %v2055, %v1786
    %v2057 = vadd.f32 %v2056, %v1787
    %v2058 = vadd.f32 %v2057, %v1788
    %v2059 = vadd.f32 %v2058, %v1789
    %v2060 = vadd.f32 %v2059, %v1790
    %v2061 = vadd.f32 %v2060, %v1791
    %v2062 = vadd.f32 %v2061, %v1792
    %v2063 = vadd.f32 %v2062, %v1793
    %v2064 = vadd.f32 %v2063, %v1794
    %v2065 = vadd.f32 %v2064, %v1795
    %v2066 = vadd.f32 %v2065, %v1796
    %v2067 = vadd.f32 %v2066, %v1797
    %v2068 = vadd.f32 %v2067, %v1798
    %v2069 = vadd.f32 %v2068, %v1799
    %v2070 = vadd.f32 %v2069, %v1800
    %v2071 = vadd.f32 %v2070, %v1801
    %v2072 = vadd.f32 %v2071, %v1802
    %v2073 = vadd.f32 %v2072, %v1803
    %v2074 = vadd.f32 %v2073, %v1804
    %v2075 = vadd.f32 %v2074, %v1805
    %v2076 = vadd.f32 %v2075, %v1806
    %v2077 = vadd.f32 %v2076, %v1807
    %v2078 = vadd.f32 %v2077, %v1808
    %v2079 = vadd.f32 %v2078, %v1809
    %v2080 = vadd.f32 %v2079, %v1810
    %v2081 = vadd.f32 %v2080, %v1811
    %v2082 = vadd.f32 %v2081, %v1812
    %v2083 = vadd.f32 %v2082, %v1813
    %v2084 = vrot.slane %v2083, 4
    %v2085 = vadd.f32 %v2083, %v2084
    %v2086 = vrot.slane %v2085, 2
    %v2087 = vadd.f32 %v2085, %v2086
    %v2088 = vrot.slane %v2087, 1
    %v2089 = vadd.f32 %v2087, %v2088
    %v2090 = vadd.f32 %v1814, %v1815
    %v2091 = vadd.f32 %v2090, %v1816
    %v2092 = vadd.f32 %v2091, %v1817
    %v2093 = vadd.f32 %v2092, %v1818
    %v2094 = vadd.f32 %v2093, %v1819
    %v2095 = vadd.f32 %v2094, %v1820
    %v2096 = vadd.f32 %v2095, %v1821
    %v2097 = vadd.f32 %v2096, %v1822
    %v2098 = vadd.f32 %v2097, %v1823
    %v2099 = vadd.f32 %v2098, %v1824
    %v2100 = vadd.f32 %v2099, %v1825
    %v2101 = vadd.f32 %v2100, %v1826
    %v2102 = vadd.f32 %v2101, %v1827
    %v2103 = vadd.f32 %v2102, %v1828
    %v2104 = vadd.f32 %v2103, %v1829
    %v2105 = vadd.f32 %v2104, %v1830
    %v2106 = vadd.f32 %v2105, %v1831
    %v2107 = vadd.f32 %v2106, %v1832
    %v2108 = vadd.f32 %v2107, %v1833
    %v2109 = vadd.f32 %v2108, %v1834
    %v2110 = vadd.f32 %v2109, %v1835
    %v2111 = vadd.f32 %v2110, %v1836
    %v2112 = vadd.f32 %v2111, %v1837
    %v2113 = vadd.f32 %v2112, %v1838
    %v2114 = vadd.f32 %v2113, %v1839
    %v2115 = vadd.f32 %v2114, %v1840
    %v2116 = vadd.f32 %v2115, %v1841
    %v2117 = vadd.f32 %v2116, %v1842
    %v2118 = vadd.f32 %v2117, %v1843
    %v2119 = vadd.f32 %v2118, %v1844
    %v2120 = vadd.f32 %v2119, %v1845
    %v2121 = vrot.slane %v2120, 4
    %v2122 = vadd.f32 %v2120, %v2121
    %v2123 = vrot.slane %v2122, 2
    %v2124 = vadd.f32 %v2122, %v2123
    %v2125 = vrot.slane %v2124, 1
    %v2126 = vadd.f32 %v2124, %v2125
    %v2127 = vadd.f32 %v1846, %v1847
    %v2128 = vadd.f32 %v2127, %v1848
    %v2129 = vadd.f32 %v2128, %v1849
    %v2130 = vadd.f32 %v2129, %v1850
    %v2131 = vadd.f32 %v2130, %v1851
    %v2132 = vadd.f32 %v2131, %v1852
    %v2133 = vadd.f32 %v2132, %v1853
    %v2134 = vadd.f32 %v2133, %v1854
    %v2135 = vadd.f32 %v2134, %v1855
    %v2136 = vadd.f32 %v2135, %v1856
    %v2137 = vadd.f32 %v2136, %v1857
    %v2138 = vadd.f32 %v2137, %v1858
    %v2139 = vadd.f32 %v2138, %v1859
    %v2140 = vadd.f32 %v2139, %v1860
    %v2141 = vadd.f32 %v2140, %v1861
    %v2142 = vadd.f32 %v2141, %v1862
    %v2143 = vadd.f32 %v2142, %v1863
    %v2144 = vadd.f32 %v2143, %v1864
    %v2145 = vadd.f32 %v2144, %v1865
    %v2146 = vadd.f32 %v2145, %v1866
    %v2147 = vadd.f32 %v2146, %v1867
    %v2148 = vadd.f32 %v2147, %v1868
    %v2149 = vadd.f32 %v2148, %v1869
    %v2150 = vadd.f32 %v2149, %v1870
    %v2151 = vadd.f32 %v2150, %v1871
    %v2152 = vadd.f32 %v2151, %v1872
    %v2153 = vadd.f32 %v2152, %v1873
    %v2154 = vadd.f32 %v2153, %v1874
    %v2155 = vadd.f32 %v2154, %v1875
    %v2156 = vadd.f32 %v2155, %v1876
    %v2157 = vadd.f32 %v2156, %v1877
    %v2158 = vrot.slane %v2157, 4
    %v2159 = vadd.f32 %v2157, %v2158
    %v2160 = vrot.slane %v2159, 2
    %v2161 = vadd.f32 %v2159, %v2160
    %v2162 = vrot.slane %v2161, 1
    %v2163 = vadd.f32 %v2161, %v2162
    %v2164 = vadd.f32 %v1878, %v1879
    %v2165 = vadd.f32 %v2164, %v1880
    %v2166 = vadd.f32 %v2165, %v1881
    %v2167 = vadd.f32 %v2166, %v1882
    %v2168 = vadd.f32 %v2167, %v1883
    %v2169 = vadd.f32 %v2168, %v1884
    %v2170 = vadd.f32 %v2169, %v1885
    %v2171 = vadd.f32 %v2170, %v1886
    %v2172 = vadd.f32 %v2171, %v1887
    %v2173 = vadd.f32 %v2172, %v1888
    %v2174 = vadd.f32 %v2173, %v1889
    %v2175 = vadd.f32 %v2174, %v1890
    %v2176 = vadd.f32 %v2175, %v1891
    %v2177 = vadd.f32 %v2176, %v1892
    %v2178 = vadd.f32 %v2177, %v1893
    %v2179 = vadd.f32 %v2178, %v1894
    %v2180 = vadd.f32 %v2179, %v1895
    %v2181 = vadd.f32 %v2180, %v1896
    %v2182 = vadd.f32 %v2181, %v1897
    %v2183 = vadd.f32 %v2182, %v1898
    %v2184 = vadd.f32 %v2183, %v1899
    %v2185 = vadd.f32 %v2184, %v1900
    %v2186 = vadd.f32 %v2185, %v1901
    %v2187 = vadd.f32 %v2186, %v1902
    %v2188 = vadd.f32 %v2187, %v1903
    %v2189 = vadd.f32 %v2188, %v1904
    %v2190 = vadd.f32 %v2189, %v1905
    %v2191 = vadd.f32 %v2190, %v1906
    %v2192 = vadd.f32 %v2191, %v1907
    %v2193 = vadd.f32 %v2192, %v1908
    %v2194 = vadd.f32 %v2193, %v1909
    %v2195 = vrot.slane %v2194, 4
    %v2196 = vadd.f32 %v2194, %v2195
    %v2197 = vrot.slane %v2196, 2
    %v2198 = vadd.f32 %v2196, %v2197
    %v2199 = vrot.slane %v2198, 1
    %v2200 = vadd.f32 %v2198, %v2199
    %v2201 = vadd.f32 %v1910, %v1911
    %v2202 = vadd.f32 %v2201, %v1912
    %v2203 = vadd.f32 %v2202, %v1913
    %v2204 = vadd.f32 %v2203, %v1914
    %v2205 = vadd.f32 %v2204, %v1915
    %v2206 = vadd.f32 %v2205, %v1916
    %v2207 = vadd.f32 %v2206, %v1917
    %v2208 = vadd.f32 %v2207, %v1918
    %v2209 = vadd.f32 %v2208, %v1919
    %v2210 = vadd.f32 %v2209, %v1920
    %v2211 = vadd.f32 %v2210, %v1921
    %v2212 = vadd.f32 %v2211, %v1922
    %v2213 = vadd.f32 %v2212, %v1923
    %v2214 = vadd.f32 %v2213, %v1924
    %v2215 = vadd.f32 %v2214, %v1925
    %v2216 = vadd.f32 %v2215, %v1926
    %v2217 = vadd.f32 %v2216, %v1927
    %v2218 = vadd.f32 %v2217, %v1928
    %v2219 = vadd.f32 %v2218, %v1929
    %v2220 = vadd.f32 %v2219, %v1930
    %v2221 = vadd.f32 %v2220, %v1931
    %v2222 = vadd.f32 %v2221, %v1932
    %v2223 = vadd.f32 %v2222, %v1933
    %v2224 = vadd.f32 %v2223, %v1934
    %v2225 = vadd.f32 %v2224, %v1935
    %v2226 = vadd.f32 %v2225, %v1936
    %v2227 = vadd.f32 %v2226, %v1937
    %v2228 = vadd.f32 %v2227, %v1938
    %v2229 = vadd.f32 %v2228, %v1939
    %v2230 = vadd.f32 %v2229, %v1940
    %v2231 = vadd.f32 %v2230, %v1941
    %v2232 = vrot.slane %v2231, 4
    %v2233 = vadd.f32 %v2231, %v2232
    %v2234 = vrot.slane %v2233, 2
    %v2235 = vadd.f32 %v2233, %v2234
    %v2236 = vrot.slane %v2235, 1
    %v2237 = vadd.f32 %v2235, %v2236
    %v2238 = vld [vmem:[#allocation7] sm:$0xff]
    %v2239 = vld [vmem:[#allocation7 + $0x8] sm:$0xff]
    %v2240 = vld [vmem:[#allocation7 + $0x10] sm:$0xff]
    %v2241 = vld [vmem:[#allocation7 + $0x18] sm:$0xff]
    %v2242 = vld [vmem:[#allocation7 + $0x20] sm:$0xff]
    %v2243 = vld [vmem:[#allocation7 + $0x28] sm:$0xff]
    %v2244 = vld [vmem:[#allocation7 + $0x30] sm:$0xff]
    %v2245 = vld [vmem:[#allocation7 + $0x38] sm:$0xff]
    %v2246 = vld [vmem:[#allocation7 + $0x40] sm:$0xff]
    %v2247 = vld [vmem:[#allocation7 + $0x48] sm:$0xff]
    %v2248 = vld [vmem:[#allocation7 + $0x50] sm:$0xff]
    %v2249 = vld [vmem:[#allocation7 + $0x58] sm:$0xff]
    %v2250 = vld [vmem:[#allocation7 + $0x60] sm:$0xff]
    %v2251 = vld [vmem:[#allocation7 + $0x68] sm:$0xff]
    %v2252 = vld [vmem:[#allocation7 + $0x70] sm:$0xff]
    %v2253 = vld [vmem:[#allocation7 + $0x78] sm:$0xff]
    %v2254 = vld [vmem:[%s4] sm:$0x1]
    %v2256 = vlaneseq
    %v2257 = vshrl.u32 %v2256, 7
    %v2258 = vsub.s32 0, %v2257
    %v2259 = vrot.slane %v2254, %v2258
    %vm2269 = vcmask 1041409
    %v2270 = vsel %vm2269, %v2015, %v1978
    %vm2271 = vcmask 1042434
    %v2272 = vsel %vm2271, %v2052, %v2270
    %vm2273 = vcmask 1043459
    %v2274 = vsel %vm2273, %v2089, %v2272
    %vm2275 = vcmask 1044484
    %v2276 = vsel %vm2275, %v2126, %v2274
    %vm2277 = vcmask 1045509
    %v2278 = vsel %vm2277, %v2163, %v2276
    %vm2279 = vcmask 1046534
    %v2280 = vsel %vm2279, %v2200, %v2278
    %vm2281 = vcmask 1047559
    %v2282 = vsel %vm2281, %v2237, %v2280
    %2284 = vmatprep.subr.mxu0 0.0
    %2285 = vmatpush1.msra.mxu0 %v2253
    %2286 = vmatprep.subr.mxu0 0.0
    %2287 = vmatpush1.msra.mxu0 %v2252
    %2288 = vmatprep.subr.mxu0 0.0
    %2289 = vmatpush1.msra.mxu0 %v2251
    %2290 = vmatprep.subr.mxu0 0.0
    %2291 = vmatpush1.msra.mxu0 %v2250
    %2292 = vmatprep.subr.mxu0 0.0
    %2293 = vmatpush1.msra.mxu0 %v2249
    %2294 = vmatprep.subr.mxu0 0.0
    %2295 = vmatpush1.msra.mxu0 %v2248
    %2296 = vmatprep.subr.mxu0 0.0
    %2297 = vmatpush1.msra.mxu0 %v2247
    %2298 = vmatprep.subr.mxu0 0.0
    %2299 = vmatpush1.msra.mxu0 %v2246
    %2300 = vmatprep.subr.mxu0 0.0
    %2301 = vmatpush1.msra.mxu0 %v2245
    %2302 = vmatprep.subr.mxu0 0.0
    %2303 = vmatpush1.msra.mxu0 %v2244
    %2304 = vmatprep.subr.mxu0 0.0
    %2305 = vmatpush1.msra.mxu0 %v2243
    %2306 = vmatprep.subr.mxu0 0.0
    %2307 = vmatpush1.msra.mxu0 %v2242
    %2308 = vmatprep.subr.mxu0 0.0
    %2309 = vmatpush1.msra.mxu0 %v2241
    %2310 = vmatprep.subr.mxu0 0.0
    %2311 = vmatpush1.msra.mxu0 %v2240
    %2312 = vmatprep.subr.mxu0 0.0
    %2313 = vmatpush1.msra.mxu0 %v2239
    %2314 = vmatprep.subr.mxu0 0.0
    %2315 = vmatpush1.msra.mxu0 %v2238
    %2316 = vmatprep.subr.mxu0 0.0
    %2317 = vmatpush2.msra.mxu0 0.0
    %2318 = vmatprep.subr.mxu0 0.0
    %2319 = vmatpush2.msra.mxu0 0.0
    %2320 = vmatprep.subr.mxu0 0.0
    %2321 = vmatpush2.msra.mxu0 0.0
    %2322 = vmatprep.subr.mxu0 0.0
    %2323 = vmatpush2.msra.mxu0 0.0
    %2324 = vmatprep.subr.mxu0 0.0
    %2325 = vmatpush2.msra.mxu0 0.0
    %2326 = vmatprep.subr.mxu0 0.0
    %2327 = vmatpush2.msra.mxu0 0.0
    %2328 = vmatprep.subr.mxu0 0.0
    %2329 = vmatpush2.msra.mxu0 0.0
    %2330 = vmatprep.subr.mxu0 0.0
    %2331 = vmatpush2.msra.mxu0 0.0
    %2332 = vmatprep.subr.mxu0 0.0
    %2333 = vmatpush2.msra.mxu0 0.0
    %2334 = vmatprep.subr.mxu0 0.0
    %2335 = vmatpush2.msra.mxu0 0.0
    %2336 = vmatprep.subr.mxu0 0.0
    %2337 = vmatpush2.msra.mxu0 0.0
    %2338 = vmatprep.subr.mxu0 0.0
    %2339 = vmatpush2.msra.mxu0 0.0
    %2340 = vmatprep.subr.mxu0 0.0
    %2341 = vmatpush2.msra.mxu0 0.0
    %2342 = vmatprep.subr.mxu0 0.0
    %2343 = vmatpush2.msra.mxu0 0.0
    %2344 = vmatprep.subr.mxu0 0.0
    %2345 = vmatpush2.msra.mxu0 0.0
    %2346 = vmatprep.subr.mxu0 0.0
    %2347 = vmatpush2.msra.mxu0 0.0
    %2348 = vmatprep.mubr.f32.mxu0 0.0
    %2349 = vmatmul.mubr.f32.gmra.mxu0 %v2282
    %v2350 = vpop.f32.mrf.mxu0
    %v2351 = vadd.f32 %v2259, %v2350
    %v2352 = vpop.f32.mrf.mxu0
    %2353 = vdwg.mxu0
    %2354 = vst [vmem:[#allocation8] sm:$0xff] %v2351
    // Predicated region
    $region34: #{tpu_custom_call.1} parent=1 // pred_check
      _
    $region35: #{tpu_custom_call.1} parent=1 // pred_check_branch
      %2356 = sbr.rel (0) target = $region37
    $region36: #{tpu_custom_call.1} parent=1 // pred_region
      %s2358 = ssub.s32 128, 128
      %2359 = vsyncadd [#allocation4], %s2358
      %s2361 = sshll.u32 [#allocation8], 4
      %s2362 = int_to_ptr.vmem [resolvable:$true] %s2361
      %2364 = dma.vmem_to_hbm [thread:$0]  %s2362, 128, %s5, [#allocation4]
    $region37: #{tpu_custom_call.1} parent=1 // pred_fallthru
      _
    // Predicated region
    $region38: #{tpu_custom_call.1} parent=1 // pred_check
      _
    $region39: #{tpu_custom_call.1} parent=1 // pred_check_branch
      %2366 = sbr.rel (0) target = $region41
    $region40: #{tpu_custom_call.1} parent=1 // pred_region
      %2367 = dma.done [#allocation4], 128
    $region41: #{tpu_custom_call.1} parent=1 // pred_fallthru
      _
    %2368 = vsyncpa [#allocation3], 1
    %2369 = vsyncpa [#allocation6], 1
    %2370 = vsyncpa [#allocation4], 1

</llo_original>
